<compile_context>
chip_gen: v7x
topology: tpu7x:2x2x1
jax: 0.10.0
libtpu: 0.0.40
codegen_flags: <defaults>
</compile_context>

<pallas_src>
import functools

import jax
import jax.numpy as jnp
from jax.experimental import pallas as pl
from jax.experimental.pallas import tpu as pltpu


def _tree_sum(xs):
  """Balanced pairwise sum: log-depth dependency chain instead of serial adds."""
  xs = list(xs)
  while len(xs) > 1:
    nxt = [xs[i] + xs[i + 1] for i in range(0, len(xs) - 1, 2)]
    if len(xs) % 2:
      nxt.append(xs[-1])
    xs = nxt
  return xs[0]


# ----------------------------- Pallas kernel --------------------------------

def _residual_unit_kernel(
    x_ref,      # (B_sub, Cin, HW)    f32 input block (NCHW, spatial flattened)
    mask_ref,   # (K*K-1, B_sub*HW)   f32 per-tap validity masks (host built)
    pslab_ref,  # (Cmid, K*K+5)       f32 packed per-channel params
    w1_ref,     # (Cmid, Cin)         bf16 expand 1x1 weight (BN scale folded)
    w3_ref,     # (Cout, Cmid)        bf16 linear 1x1 weight (BN scale folded)
    sew1_ref,   # (Cse, Cmid)         f32 SE conv1 weight
    sew2_ref,   # (Cmid, Cse)         f32 SE conv2 weight
    o_ref,      # (B_sub, Cout, HW)   f32 output block
    *, H, W, K, B_sub,
):
  HW = H * W
  LW = B_sub * HW
  pad = (K - 1) // 2
  KK = K * K
  Cse = sew1_ref.shape[0]
  Cout = w3_ref.shape[0]

  # Column layout of the packed per-channel parameter slab.
  C_B1, C_B2, C_SEB1, C_SEB2, C_B3 = KK, KK + 1, KK + 2, KK + 3, KK + 4

  # Gather B_sub items onto one wide lane axis (segments are 128-lane aligned
  # because HW is a multiple of 128) -> lane-dense VPU/MXU work, one weight
  # push per matmul for the whole step.
  x = jnp.concatenate([x_ref[b] for b in range(B_sub)], axis=1)    # (Cin, LW)

  # ---- expand_conv: 1x1 conv (bf16 MXU, f32 acc) + folded-BN shift + relu ---
  y = jnp.dot(w1_ref[...], x.astype(jnp.bfloat16),
              preferred_element_type=jnp.float32)                  # (Cmid, LW)
  y = jnp.maximum(y + pslab_ref[:, C_B1:C_B1 + 1], 0.0)

  # ---- bottleneck_conv: depthwise KxK (stride 1) via in-register lane rolls.
  # For tap (kh,kw): out[p] += w[kh,kw] * y[p + d],  d = (kh-pad)*W + (kw-pad).
  # pltpu.roll (circular) gives y[p+d]; positions whose source row/column falls
  # outside the image (including any wrap across item boundaries) are killed by
  # the precomputed mask for that tap.
  tc = pad * K + pad                                               # centre tap
  contribs = [y * pslab_ref[:, tc:tc + 1]]
  m = 0
  for kh in range(K):
    for kw in range(K):
      if kh == pad and kw == pad:
        continue
      d = (kh - pad) * W + (kw - pad)
      t = kh * K + kw
      rolled = pltpu.roll(y, shift=(-d) % LW, axis=1)              # out[p]=y[p+d]
      contribs.append(rolled * mask_ref[m:m + 1, :] * pslab_ref[:, t:t + 1])
      m += 1
  z = jnp.maximum(_tree_sum(contribs) + pslab_ref[:, C_B2:C_B2 + 1], 0.0)

  # ---- SE module (per item: pool -> 1x1 -> relu -> 1x1 -> hard_sigmoid) -----
  inv_hw = 1.0 / HW
  zs_parts = []
  for b in range(B_sub):
    z_b = z[:, b * HW:(b + 1) * HW]                                # (Cmid, HW)
    pooled = jnp.sum(z_b, axis=1, keepdims=True) * inv_hw          # (Cmid, 1)
    se = jnp.dot(sew1_ref[...], pooled, preferred_element_type=jnp.float32)
    se = jnp.maximum(se + pslab_ref[:Cse, C_SEB1:C_SEB1 + 1], 0.0)
    se = jnp.dot(sew2_ref[...], se, preferred_element_type=jnp.float32)
    se = se + pslab_ref[:, C_SEB2:C_SEB2 + 1]                      # (Cmid, 1)
    # myocr hard_sigmoid: relu6(1.2*x + 3) / 6
    se = jnp.clip(1.2 * se + 3.0, 0.0, 6.0) * (1.0 / 6.0)
    zs_parts.append(z_b * se)                                      # lane-broadcast
  zs = jnp.concatenate(zs_parts, axis=1)                           # (Cmid, LW)

  # ---- linear_conv (bf16 MXU, BN scale folded) + shift + shortcut -----------
  out = jnp.dot(w3_ref[...], zs.astype(jnp.bfloat16),
                preferred_element_type=jnp.float32)                # (Cout, LW)
  out = out + pslab_ref[:Cout, C_B3:C_B3 + 1] + x                  # Cin == Cout

  for b in range(B_sub):                                           # lane-dense stores
    o_ref[b] = out[:, b * HW:(b + 1) * HW].astype(o_ref.dtype)


# ------------------------------ wrapper --------------------------------------

def residual_unit_pallas(x_nchw, p, *, K=3, stride=1, use_se=True, act="relu",
                         items_per_step=None):
  """x_nchw: (N, Cin, H, W) float32. Returns (N, Cout, H, W) float32."""
  N, Cin, H, W = x_nchw.shape
  Cmid = p["w1"].shape[1]
  Cout = p["w3"].shape[1]
  Cse = p["sew1"].shape[1]
  HW = H * W
  KK = K * K

  # Only the configuration exercised by this module instance is implemented.
  assert stride == 1 and Cin == Cout and use_se and act == "relu"
  # TODO(synk): stride=2 / use_se=False / hard_swish ResidualUnit variants are
  # not implemented in this kernel path.

  if items_per_step is None:
    # Pack as many batch items per step as possible while keeping >=2 grid
    # steps (v7x has 2 TensorCores). Only pack >1 item when HW is a multiple of
    # 128 so per-item lane segments stay vreg-aligned.
    if N >= 4 and N % 2 == 0 and HW % 128 == 0:
      items_per_step = N // 2
    else:
      items_per_step = 1
  B_sub = items_per_step
  assert N % B_sub == 0
  G = N // B_sub
  LW = B_sub * HW
  # NOTE: at realistic feature-map sizes re-derive B_sub/HW tiling against the
  # VMEM budget (v7x: 64 MiB physical / 32 MiB default scoped).

  # ---- fold BN scales into conv weights; channel-major (out-channel rows) ---
  w1 = (p["w1"] * p["s1"]).T.astype(jnp.bfloat16)       # (Cmid, Cin)  bf16 MXU
  w3 = (p["w3"] * p["s3"]).T.astype(jnp.bfloat16)       # (Cout, Cmid) bf16 MXU
  sew1 = p["sew1"].T.astype(jnp.float32)                # (Cse, Cmid)  f32 (SE gate)
  sew2 = p["sew2"].T.astype(jnp.float32)                # (Cmid, Cse)
  dw = (p["dw"] * p["s2"]).T                            # (Cmid, K*K)  scale folded

  # ---- pack per-channel vectors into one f32 slab (one DMA instead of six) --
  NPCOL = KK + 5
  pslab = jnp.zeros((Cmid, NPCOL), jnp.float32)
  pslab = pslab.at[:, :KK].set(dw)                      # depthwise taps
  pslab = pslab.at[:, KK + 0].set(p["b1"][0])           # expand BN shift
  pslab = pslab.at[:, KK + 1].set(p["b2"][0])           # bottleneck BN shift
  pslab = pslab.at[:Cse, KK + 2].set(p["seb1"][0])      # SE conv1 bias
  pslab = pslab.at[:, KK + 3].set(p["seb2"][0])         # SE conv2 bias
  pslab = pslab.at[:Cout, KK + 4].set(p["b3"][0])       # linear BN shift

  # ---- host-precomputed per-tap validity masks (constant over grid/batch) ---
  pad_ = (K - 1) // 2
  q = jnp.arange(HW, dtype=jnp.int32)
  hh, ww = q // W, q % W
  rows = []
  for kh in range(K):
    for kw in range(K):
      if kh == pad_ and kw == pad_:
        continue
      dh, dwc = kh - pad_, kw - pad_
      ok = (hh + dh >= 0) & (hh + dh < H) & (ww + dwc >= 0) & (ww + dwc < W)
      rows.append(ok.astype(jnp.float32))
  masks = jnp.tile(jnp.stack(rows, 0), (1, B_sub))      # (K*K-1, LW)

  x = x_nchw.reshape(N, Cin, HW)                        # NCHW flatten (free)

  const2d = lambda shape: pl.BlockSpec(shape, lambda g: (0, 0))

  out = pl.pallas_call(
      functools.partial(_residual_unit_kernel, H=H, W=W, K=K, B_sub=B_sub),
      out_shape=jax.ShapeDtypeStruct((N, Cout, HW), jnp.float32),
      grid_spec=pltpu.PrefetchScalarGridSpec(
          num_scalar_prefetch=0,
          grid=(G,),
          in_specs=[
              pl.BlockSpec((B_sub, Cin, HW), lambda g: (g, 0, 0)),   # x
              const2d((KK - 1, LW)),                                 # masks
              const2d((Cmid, NPCOL)),                                # pslab
              const2d((Cmid, Cin)),                                  # w1 (bf16)
              const2d((Cout, Cmid)),                                 # w3 (bf16)
              const2d((Cse, Cmid)),                                  # sew1
              const2d((Cmid, Cse)),                                  # sew2
          ],
          out_specs=pl.BlockSpec((B_sub, Cout, HW), lambda g: (g, 0, 0)),
      ),
      compiler_params=pltpu.CompilerParams(
          dimension_semantics=("parallel",)),     # batch groups independent
  )(x, masks, pslab, w1, w3, sew1, sew2)

  return out.reshape(N, Cout, H, W)


# ------------------------- pure-JAX reference --------------------------------

def residual_unit_ref(x_nchw, p, *, K=3):
  x = jnp.transpose(x_nchw, (0, 2, 3, 1)).astype(jnp.float32)      # NHWC
  N, H, W, Cin = x.shape
  Cmid = p["w1"].shape[1]
  pad = (K - 1) // 2

  y = jnp.einsum("nhwc,cd->nhwd", x, p["w1"])
  y = jnp.maximum(y * p["s1"][0] + p["b1"][0], 0.0)

  yp = jnp.pad(y, ((0, 0), (pad, pad), (pad, pad), (0, 0)))
  acc = jnp.zeros((N, H, W, Cmid), jnp.float32)
  for kh in range(K):
    for kw in range(K):
      acc = acc + yp[:, kh:kh + H, kw:kw + W, :] * p["dw"][kh * K + kw]
  z = jnp.maximum(acc * p["s2"][0] + p["b2"][0], 0.0)

  pooled = jnp.mean(z, axis=(1, 2))                                # (N, Cmid)
  se = jnp.maximum(pooled @ p["sew1"] + p["seb1"][0], 0.0)
  se = se @ p["sew2"] + p["seb2"][0]
  se = jnp.clip(1.2 * se + 3.0, 0.0, 6.0) / 6.0                    # myocr hard_sigmoid
  z = z * se[:, None, None, :]

  out = jnp.einsum("nhwc,cd->nhwd", z, p["w3"]) * p["s3"][0] + p["b3"][0]
  out = out + x                                                    # shortcut
  return jnp.transpose(out, (0, 3, 1, 2))


# ------------------------------ params ---------------------------------------

def fold_bn(gamma, beta, mean, var, eps=1e-5):
  scale = gamma / jnp.sqrt(var + eps)
  shift = beta - mean * scale
  return scale.reshape(1, -1), shift.reshape(1, -1)


def make_params(key, Cin, Cmid, Cout, K, reduction=4):
  ks = jax.random.split(key, 16)
  Cse = Cmid // reduction
  u = lambda k, s, sc=0.2: jax.random.normal(k, s, jnp.float32) * sc

  w1 = u(ks[0], (Cin, Cmid))            # torch (Cmid,Cin,1,1) transposed
  dw = u(ks[1], (K * K, Cmid))          # torch (Cmid,1,K,K) -> tap-major
  w3 = u(ks[2], (Cmid, Cout))
  sew1 = u(ks[3], (Cmid, Cse))
  seb1 = u(ks[4], (1, Cse), 0.1)
  sew2 = u(ks[5], (Cse, Cmid))
  seb2 = u(ks[6], (1, Cmid), 0.1)

  def bn(k, C):
    k1, k2, k3, k4 = jax.random.split(k, 4)
    gamma = 1.0 + 0.2 * jax.random.normal(k1, (C,), jnp.float32)
    beta = 0.1 * jax.random.normal(k2, (C,), jnp.float32)
    mean = 0.1 * jax.random.normal(k3, (C,), jnp.float32)
    var = jnp.abs(1.0 + 0.2 * jax.random.normal(k4, (C,), jnp.float32))
    return fold_bn(gamma, beta, mean, var)

  s1, b1 = bn(ks[7], Cmid)
  s2, b2 = bn(ks[8], Cmid)
  s3, b3 = bn(ks[9], Cout)

  return dict(w1=w1, s1=s1, b1=b1, dw=dw, s2=s2, b2=b2,
              sew1=sew1, seb1=seb1, sew2=sew2, seb2=seb2,
              w3=w3, s3=s3, b3=b3)


# ------------------------------- main -----------------------------------------

if __name__ == "__main__":
  key = jax.random.PRNGKey(0)
  kx, kp = jax.random.split(key)

  # 2 grid steps x 2 batch items per step (512-lane working set per step).
  N, Cin, H, W = 4, 8, 16, 16
  Cmid, Cout, K = 16, 8, 3              # stride=1, use_se=True, act='relu'

  x = jax.random.normal(kx, (N, Cin, H, W), jnp.float32)   # PyTorch NCHW input
  params = make_params(kp, Cin, Cmid, Cout, K)

  out = residual_unit_pallas(x, params, K=K)
  out = jax.block_until_ready(out)

  ref = residual_unit_ref(x, params, K=K)
  assert out.shape == (N, Cout, H, W)
  # Tolerance accounts for bf16 MXU operands (f32 accumulation) in the two
  # 1x1 convs; observed error is ~1e-3 scale at these magnitudes.
  err = float(jnp.max(jnp.abs(out - ref)))
  assert jnp.allclose(out, ref, atol=3e-2, rtol=3e-2), (
      f"mismatch vs JAX reference, max abs err {err}")

  print("KERNEL_OK")
</pallas_src>

<mosaic_0001>
module attributes {stable_mosaic.version = 11 : i64} {
  func.func @_residual_unit_kernel(%arg0: i32, %arg1: memref<2x8x256xf32, #tpu.memory_space<vmem>>, %arg2: memref<8x512xf32, #tpu.memory_space<vmem>>, %arg3: memref<16x14xf32, #tpu.memory_space<vmem>>, %arg4: memref<16x8xbf16, #tpu.memory_space<vmem>>, %arg5: memref<8x16xbf16, #tpu.memory_space<vmem>>, %arg6: memref<4x16xf32, #tpu.memory_space<vmem>>, %arg7: memref<16x4xf32, #tpu.memory_space<vmem>>, %arg8: memref<2x8x256xf32, #tpu.memory_space<vmem>>) attributes {dimension_semantics = [#tpu.dimension_semantics<parallel>], iteration_bounds = array<i64: 2>, scalar_prefetch = 0 : i64, scratch_operands = 0 : i64, tpu.core_type = #tpu.core_type<tc>, window_params = [{transform_indices = @transform_0, window_bounds = array<i64: 2, 8, 256>}, {pipeline_mode = #tpu.pipeline_mode<synchronous>, transform_indices = @transform_1, window_bounds = array<i64: 8, 512>}, {pipeline_mode = #tpu.pipeline_mode<synchronous>, transform_indices = @transform_2, window_bounds = array<i64: 16, 14>}, {pipeline_mode = #tpu.pipeline_mode<synchronous>, transform_indices = @transform_3, window_bounds = array<i64: 16, 8>}, {pipeline_mode = #tpu.pipeline_mode<synchronous>, transform_indices = @transform_4, window_bounds = array<i64: 8, 16>}, {pipeline_mode = #tpu.pipeline_mode<synchronous>, transform_indices = @transform_5, window_bounds = array<i64: 4, 16>}, {pipeline_mode = #tpu.pipeline_mode<synchronous>, transform_indices = @transform_6, window_bounds = array<i64: 16, 4>}, {transform_indices = @transform_7, window_bounds = array<i64: 2, 8, 256>}]} {
    %c0 = arith.constant 0 : index
    %c0_0 = arith.constant 0 : index
    %c0_1 = arith.constant 0 : index
    %0 = vector.load %arg1[%c0, %c0_0, %c0_1] : memref<2x8x256xf32, #tpu.memory_space<vmem>>, vector<1x8x256xf32>
    %1 = vector.shape_cast %0 : vector<1x8x256xf32> to vector<8x256xf32>
    %c1 = arith.constant 1 : index
    %c0_2 = arith.constant 0 : index
    %c0_3 = arith.constant 0 : index
    %2 = vector.load %arg1[%c1, %c0_2, %c0_3] : memref<2x8x256xf32, #tpu.memory_space<vmem>>, vector<1x8x256xf32>
    %3 = vector.shape_cast %2 : vector<1x8x256xf32> to vector<8x256xf32>
    %4 = tpu.concatenate %1, %3 in 1 : vector<8x256xf32>, vector<8x256xf32> -> vector<8x512xf32>
    %c0_4 = arith.constant 0 : index
    %c0_5 = arith.constant 0 : index
    %5 = vector.load %arg4[%c0_4, %c0_5] : memref<16x8xbf16, #tpu.memory_space<vmem>>, vector<16x8xbf16>
    %6 = arith.truncf %4 : vector<8x512xf32> to vector<8x512xbf16>
    %cst = arith.constant dense<0.000000e+00> : vector<16x512xf32>
    %7 = tpu.matmul %5, %6, %cst {dimension_numbers = #tpu.dot_dimension_numbers<[1], [0], [0], [1], [0, 0, 1, 1], [], []>} : vector<16x8xbf16>, vector<8x512xbf16>, vector<16x512xf32> -> vector<16x512xf32>
    %c0_6 = arith.constant 0 : index
    %c9 = arith.constant 9 : index
    %8 = vector.load %arg3[%c0_6, %c9] : memref<16x14xf32, #tpu.memory_space<vmem>>, vector<16x1xf32>
    %9 = vector.broadcast %8 : vector<16x1xf32> to vector<16x512xf32>
    %10 = arith.addf %7, %9 : vector<16x512xf32>
    %cst_7 = arith.constant 0.000000e+00 : f32
    %11 = vector.broadcast %cst_7 : f32 to vector<16x512xf32>
    %12 = arith.maximumf %10, %11 : vector<16x512xf32>
    %c0_8 = arith.constant 0 : index
    %c4 = arith.constant 4 : index
    %13 = vector.load %arg3[%c0_8, %c4] : memref<16x14xf32, #tpu.memory_space<vmem>>, vector<16x1xf32>
    %14 = vector.broadcast %13 : vector<16x1xf32> to vector<16x512xf32>
    %15 = arith.mulf %12, %14 : vector<16x512xf32>
    %c17_i32 = arith.constant 17 : i32
    %16 = tpu.dynamic_rotate %12 by %c17_i32 dim 1 : vector<16x512xf32>, i32 -> vector<16x512xf32>
    %c0_9 = arith.constant 0 : index
    %c0_10 = arith.constant 0 : index
    %17 = vector.load %arg2[%c0_9, %c0_10] : memref<8x512xf32, #tpu.memory_space<vmem>>, vector<1x512xf32>
    %18 = vector.broadcast %17 : vector<1x512xf32> to vector<16x512xf32>
    %19 = arith.mulf %16, %18 : vector<16x512xf32>
    %c0_11 = arith.constant 0 : index
    %c0_12 = arith.constant 0 : index
    %20 = vector.load %arg3[%c0_11, %c0_12] : memref<16x14xf32, #tpu.memory_space<vmem>>, vector<16x1xf32>
    %21 = vector.broadcast %20 : vector<16x1xf32> to vector<16x512xf32>
    %22 = arith.mulf %19, %21 : vector<16x512xf32>
    %c16_i32 = arith.constant 16 : i32
    %23 = tpu.dynamic_rotate %12 by %c16_i32 dim 1 : vector<16x512xf32>, i32 -> vector<16x512xf32>
    %c1_13 = arith.constant 1 : index
    %c0_14 = arith.constant 0 : index
    %24 = vector.load %arg2[%c1_13, %c0_14] : memref<8x512xf32, #tpu.memory_space<vmem>>, vector<1x512xf32>
    %25 = vector.broadcast %24 : vector<1x512xf32> to vector<16x512xf32>
    %26 = arith.mulf %23, %25 : vector<16x512xf32>
    %c0_15 = arith.constant 0 : index
    %c1_16 = arith.constant 1 : index
    %27 = vector.load %arg3[%c0_15, %c1_16] : memref<16x14xf32, #tpu.memory_space<vmem>>, vector<16x1xf32>
    %28 = vector.broadcast %27 : vector<16x1xf32> to vector<16x512xf32>
    %29 = arith.mulf %26, %28 : vector<16x512xf32>
    %c15_i32 = arith.constant 15 : i32
    %30 = tpu.dynamic_rotate %12 by %c15_i32 dim 1 : vector<16x512xf32>, i32 -> vector<16x512xf32>
    %c2 = arith.constant 2 : index
    %c0_17 = arith.constant 0 : index
    %31 = vector.load %arg2[%c2, %c0_17] : memref<8x512xf32, #tpu.memory_space<vmem>>, vector<1x512xf32>
    %32 = vector.broadcast %31 : vector<1x512xf32> to vector<16x512xf32>
    %33 = arith.mulf %30, %32 : vector<16x512xf32>
    %c0_18 = arith.constant 0 : index
    %c2_19 = arith.constant 2 : index
    %34 = vector.load %arg3[%c0_18, %c2_19] : memref<16x14xf32, #tpu.memory_space<vmem>>, vector<16x1xf32>
    %35 = vector.broadcast %34 : vector<16x1xf32> to vector<16x512xf32>
    %36 = arith.mulf %33, %35 : vector<16x512xf32>
    %c1_i32 = arith.constant 1 : i32
    %37 = tpu.dynamic_rotate %12 by %c1_i32 dim 1 : vector<16x512xf32>, i32 -> vector<16x512xf32>
    %c3 = arith.constant 3 : index
    %c0_20 = arith.constant 0 : index
    %38 = vector.load %arg2[%c3, %c0_20] : memref<8x512xf32, #tpu.memory_space<vmem>>, vector<1x512xf32>
    %39 = vector.broadcast %38 : vector<1x512xf32> to vector<16x512xf32>
    %40 = arith.mulf %37, %39 : vector<16x512xf32>
    %c0_21 = arith.constant 0 : index
    %c3_22 = arith.constant 3 : index
    %41 = vector.load %arg3[%c0_21, %c3_22] : memref<16x14xf32, #tpu.memory_space<vmem>>, vector<16x1xf32>
    %42 = vector.broadcast %41 : vector<16x1xf32> to vector<16x512xf32>
    %43 = arith.mulf %40, %42 : vector<16x512xf32>
    %c511_i32 = arith.constant 511 : i32
    %44 = tpu.dynamic_rotate %12 by %c511_i32 dim 1 : vector<16x512xf32>, i32 -> vector<16x512xf32>
    %c4_23 = arith.constant 4 : index
    %c0_24 = arith.constant 0 : index
    %45 = vector.load %arg2[%c4_23, %c0_24] : memref<8x512xf32, #tpu.memory_space<vmem>>, vector<1x512xf32>
    %46 = vector.broadcast %45 : vector<1x512xf32> to vector<16x512xf32>
    %47 = arith.mulf %44, %46 : vector<16x512xf32>
    %c0_25 = arith.constant 0 : index
    %c5 = arith.constant 5 : index
    %48 = vector.load %arg3[%c0_25, %c5] : memref<16x14xf32, #tpu.memory_space<vmem>>, vector<16x1xf32>
    %49 = vector.broadcast %48 : vector<16x1xf32> to vector<16x512xf32>
    %50 = arith.mulf %47, %49 : vector<16x512xf32>
    %c497_i32 = arith.constant 497 : i32
    %51 = tpu.dynamic_rotate %12 by %c497_i32 dim 1 : vector<16x512xf32>, i32 -> vector<16x512xf32>
    %c5_26 = arith.constant 5 : index
    %c0_27 = arith.constant 0 : index
    %52 = vector.load %arg2[%c5_26, %c0_27] : memref<8x512xf32, #tpu.memory_space<vmem>>, vector<1x512xf32>
    %53 = vector.broadcast %52 : vector<1x512xf32> to vector<16x512xf32>
    %54 = arith.mulf %51, %53 : vector<16x512xf32>
    %c0_28 = arith.constant 0 : index
    %c6 = arith.constant 6 : index
    %55 = vector.load %arg3[%c0_28, %c6] : memref<16x14xf32, #tpu.memory_space<vmem>>, vector<16x1xf32>
    %56 = vector.broadcast %55 : vector<16x1xf32> to vector<16x512xf32>
    %57 = arith.mulf %54, %56 : vector<16x512xf32>
    %c496_i32 = arith.constant 496 : i32
    %58 = tpu.dynamic_rotate %12 by %c496_i32 dim 1 : vector<16x512xf32>, i32 -> vector<16x512xf32>
    %c6_29 = arith.constant 6 : index
    %c0_30 = arith.constant 0 : index
    %59 = vector.load %arg2[%c6_29, %c0_30] : memref<8x512xf32, #tpu.memory_space<vmem>>, vector<1x512xf32>
    %60 = vector.broadcast %59 : vector<1x512xf32> to vector<16x512xf32>
    %61 = arith.mulf %58, %60 : vector<16x512xf32>
    %c0_31 = arith.constant 0 : index
    %c7 = arith.constant 7 : index
    %62 = vector.load %arg3[%c0_31, %c7] : memref<16x14xf32, #tpu.memory_space<vmem>>, vector<16x1xf32>
    %63 = vector.broadcast %62 : vector<16x1xf32> to vector<16x512xf32>
    %64 = arith.mulf %61, %63 : vector<16x512xf32>
    %c495_i32 = arith.constant 495 : i32
    %65 = tpu.dynamic_rotate %12 by %c495_i32 dim 1 : vector<16x512xf32>, i32 -> vector<16x512xf32>
    %c7_32 = arith.constant 7 : index
    %c0_33 = arith.constant 0 : index
    %66 = vector.load %arg2[%c7_32, %c0_33] : memref<8x512xf32, #tpu.memory_space<vmem>>, vector<1x512xf32>
    %67 = vector.broadcast %66 : vector<1x512xf32> to vector<16x512xf32>
    %68 = arith.mulf %65, %67 : vector<16x512xf32>
    %c0_34 = arith.constant 0 : index
    %c8 = arith.constant 8 : index
    %69 = vector.load %arg3[%c0_34, %c8] : memref<16x14xf32, #tpu.memory_space<vmem>>, vector<16x1xf32>
    %70 = vector.broadcast %69 : vector<16x1xf32> to vector<16x512xf32>
    %71 = arith.mulf %68, %70 : vector<16x512xf32>
    %72 = arith.addf %15, %22 : vector<16x512xf32>
    %73 = arith.addf %29, %36 : vector<16x512xf32>
    %74 = arith.addf %43, %50 : vector<16x512xf32>
    %75 = arith.addf %57, %64 : vector<16x512xf32>
    %76 = arith.addf %72, %73 : vector<16x512xf32>
    %77 = arith.addf %74, %75 : vector<16x512xf32>
    %78 = arith.addf %76, %77 : vector<16x512xf32>
    %79 = arith.addf %78, %71 : vector<16x512xf32>
    %c0_35 = arith.constant 0 : index
    %c10 = arith.constant 10 : index
    %80 = vector.load %arg3[%c0_35, %c10] : memref<16x14xf32, #tpu.memory_space<vmem>>, vector<16x1xf32>
    %81 = vector.broadcast %80 : vector<16x1xf32> to vector<16x512xf32>
    %82 = arith.addf %79, %81 : vector<16x512xf32>
    %cst_36 = arith.constant 0.000000e+00 : f32
    %83 = vector.broadcast %cst_36 : f32 to vector<16x512xf32>
    %84 = arith.maximumf %82, %83 : vector<16x512xf32>
    %85 = vector.extract_strided_slice %84 {offsets = [0, 0], sizes = [16, 256], strides = [1, 1]} : vector<16x512xf32> to vector<16x256xf32>
    %cst_37 = arith.constant dense<0.000000e+00> : vector<16xf32>
    %86 = vector.multi_reduction <add>, %85, %cst_37 [1] : vector<16x256xf32> to vector<16xf32>
    %87 = vector.shape_cast %86 : vector<16xf32> to vector<16x1xf32>
    %cst_38 = arith.constant 3.906250e-03 : f32
    %88 = vector.broadcast %cst_38 : f32 to vector<16x1xf32>
    %89 = arith.mulf %87, %88 : vector<16x1xf32>
    %c0_39 = arith.constant 0 : index
    %c0_40 = arith.constant 0 : index
    %90 = vector.load %arg6[%c0_39, %c0_40] : memref<4x16xf32, #tpu.memory_space<vmem>>, vector<4x16xf32>
    %cst_41 = arith.constant dense<0.000000e+00> : vector<4x1xf32>
    %91 = tpu.matmul %90, %89, %cst_41 {dimension_numbers = #tpu.dot_dimension_numbers<[1], [0], [0], [1], [0, 0, 1, 1], [], []>} : vector<4x16xf32>, vector<16x1xf32>, vector<4x1xf32> -> vector<4x1xf32>
    %c0_42 = arith.constant 0 : index
    %c11 = arith.constant 11 : index
    %92 = vector.load %arg3[%c0_42, %c11] : memref<16x14xf32, #tpu.memory_space<vmem>>, vector<4x1xf32>
    %93 = arith.addf %91, %92 : vector<4x1xf32>
    %cst_43 = arith.constant 0.000000e+00 : f32
    %94 = vector.broadcast %cst_43 : f32 to vector<4x1xf32>
    %95 = arith.maximumf %93, %94 : vector<4x1xf32>
    %c0_44 = arith.constant 0 : index
    %c0_45 = arith.constant 0 : index
    %96 = vector.load %arg7[%c0_44, %c0_45] : memref<16x4xf32, #tpu.memory_space<vmem>>, vector<16x4xf32>
    %cst_46 = arith.constant dense<0.000000e+00> : vector<16x1xf32>
    %97 = tpu.matmul %96, %95, %cst_46 {dimension_numbers = #tpu.dot_dimension_numbers<[1], [0], [0], [1], [0, 0, 1, 1], [], []>} : vector<16x4xf32>, vector<4x1xf32>, vector<16x1xf32> -> vector<16x1xf32>
    %c0_47 = arith.constant 0 : index
    %c12 = arith.constant 12 : index
    %98 = vector.load %arg3[%c0_47, %c12] : memref<16x14xf32, #tpu.memory_space<vmem>>, vector<16x1xf32>
    %99 = arith.addf %97, %98 : vector<16x1xf32>
    %cst_48 = arith.constant 1.200000e+00 : f32
    %100 = vector.broadcast %cst_48 : f32 to vector<16x1xf32>
    %101 = arith.mulf %100, %99 : vector<16x1xf32>
    %cst_49 = arith.constant 3.000000e+00 : f32
    %102 = vector.broadcast %cst_49 : f32 to vector<16x1xf32>
    %103 = arith.addf %101, %102 : vector<16x1xf32>
    %cst_50 = arith.constant 0.000000e+00 : f32
    %cst_51 = arith.constant 6.000000e+00 : f32
    %104 = vector.broadcast %cst_50 : f32 to vector<16x1xf32>
    %105 = arith.maximumf %104, %103 : vector<16x1xf32>
    %106 = vector.broadcast %cst_51 : f32 to vector<16x1xf32>
    %107 = arith.minimumf %106, %105 : vector<16x1xf32>
    %cst_52 = arith.constant 0.166666672 : f32
    %108 = vector.broadcast %cst_52 : f32 to vector<16x1xf32>
    %109 = arith.mulf %107, %108 : vector<16x1xf32>
    %110 = vector.broadcast %109 : vector<16x1xf32> to vector<16x256xf32>
    %111 = arith.mulf %85, %110 : vector<16x256xf32>
    %112 = vector.extract_strided_slice %84 {offsets = [0, 256], sizes = [16, 256], strides = [1, 1]} : vector<16x512xf32> to vector<16x256xf32>
    %cst_53 = arith.constant dense<0.000000e+00> : vector<16xf32>
    %113 = vector.multi_reduction <add>, %112, %cst_53 [1] : vector<16x256xf32> to vector<16xf32>
    %114 = vector.shape_cast %113 : vector<16xf32> to vector<16x1xf32>
    %cst_54 = arith.constant 3.906250e-03 : f32
    %115 = vector.broadcast %cst_54 : f32 to vector<16x1xf32>
    %116 = arith.mulf %114, %115 : vector<16x1xf32>
    %c0_55 = arith.constant 0 : index
    %c0_56 = arith.constant 0 : index
    %117 = vector.load %arg6[%c0_55, %c0_56] : memref<4x16xf32, #tpu.memory_space<vmem>>, vector<4x16xf32>
    %cst_57 = arith.constant dense<0.000000e+00> : vector<4x1xf32>
    %118 = tpu.matmul %117, %116, %cst_57 {dimension_numbers = #tpu.dot_dimension_numbers<[1], [0], [0], [1], [0, 0, 1, 1], [], []>} : vector<4x16xf32>, vector<16x1xf32>, vector<4x1xf32> -> vector<4x1xf32>
    %c0_58 = arith.constant 0 : index
    %c11_59 = arith.constant 11 : index
    %119 = vector.load %arg3[%c0_58, %c11_59] : memref<16x14xf32, #tpu.memory_space<vmem>>, vector<4x1xf32>
    %120 = arith.addf %118, %119 : vector<4x1xf32>
    %cst_60 = arith.constant 0.000000e+00 : f32
    %121 = vector.broadcast %cst_60 : f32 to vector<4x1xf32>
    %122 = arith.maximumf %120, %121 : vector<4x1xf32>
    %c0_61 = arith.constant 0 : index
    %c0_62 = arith.constant 0 : index
    %123 = vector.load %arg7[%c0_61, %c0_62] : memref<16x4xf32, #tpu.memory_space<vmem>>, vector<16x4xf32>
    %cst_63 = arith.constant dense<0.000000e+00> : vector<16x1xf32>
    %124 = tpu.matmul %123, %122, %cst_63 {dimension_numbers = #tpu.dot_dimension_numbers<[1], [0], [0], [1], [0, 0, 1, 1], [], []>} : vector<16x4xf32>, vector<4x1xf32>, vector<16x1xf32> -> vector<16x1xf32>
    %c0_64 = arith.constant 0 : index
    %c12_65 = arith.constant 12 : index
    %125 = vector.load %arg3[%c0_64, %c12_65] : memref<16x14xf32, #tpu.memory_space<vmem>>, vector<16x1xf32>
    %126 = arith.addf %124, %125 : vector<16x1xf32>
    %cst_66 = arith.constant 1.200000e+00 : f32
    %127 = vector.broadcast %cst_66 : f32 to vector<16x1xf32>
    %128 = arith.mulf %127, %126 : vector<16x1xf32>
    %cst_67 = arith.constant 3.000000e+00 : f32
    %129 = vector.broadcast %cst_67 : f32 to vector<16x1xf32>
    %130 = arith.addf %128, %129 : vector<16x1xf32>
    %cst_68 = arith.constant 0.000000e+00 : f32
    %cst_69 = arith.constant 6.000000e+00 : f32
    %131 = vector.broadcast %cst_68 : f32 to vector<16x1xf32>
    %132 = arith.maximumf %131, %130 : vector<16x1xf32>
    %133 = vector.broadcast %cst_69 : f32 to vector<16x1xf32>
    %134 = arith.minimumf %133, %132 : vector<16x1xf32>
    %cst_70 = arith.constant 0.166666672 : f32
    %135 = vector.broadcast %cst_70 : f32 to vector<16x1xf32>
    %136 = arith.mulf %134, %135 : vector<16x1xf32>
    %137 = vector.broadcast %136 : vector<16x1xf32> to vector<16x256xf32>
    %138 = arith.mulf %112, %137 : vector<16x256xf32>
    %139 = tpu.concatenate %111, %138 in 1 : vector<16x256xf32>, vector<16x256xf32> -> vector<16x512xf32>
    %c0_71 = arith.constant 0 : index
    %c0_72 = arith.constant 0 : index
    %140 = vector.load %arg5[%c0_71, %c0_72] : memref<8x16xbf16, #tpu.memory_space<vmem>>, vector<8x16xbf16>
    %141 = arith.truncf %139 : vector<16x512xf32> to vector<16x512xbf16>
    %cst_73 = arith.constant dense<0.000000e+00> : vector<8x512xf32>
    %142 = tpu.matmul %140, %141, %cst_73 {dimension_numbers = #tpu.dot_dimension_numbers<[1], [0], [0], [1], [0, 0, 1, 1], [], []>} : vector<8x16xbf16>, vector<16x512xbf16>, vector<8x512xf32> -> vector<8x512xf32>
    %c0_74 = arith.constant 0 : index
    %c13 = arith.constant 13 : index
    %143 = vector.load %arg3[%c0_74, %c13] : memref<16x14xf32, #tpu.memory_space<vmem>>, vector<8x1xf32>
    %144 = vector.broadcast %143 : vector<8x1xf32> to vector<8x512xf32>
    %145 = arith.addf %142, %144 : vector<8x512xf32>
    %146 = arith.addf %145, %4 : vector<8x512xf32>
    %147 = vector.extract_strided_slice %146 {offsets = [0, 0], sizes = [8, 256], strides = [1, 1]} : vector<8x512xf32> to vector<8x256xf32>
    %c0_75 = arith.constant 0 : index
    %c0_76 = arith.constant 0 : index
    %c0_77 = arith.constant 0 : index
    %148 = vector.load %arg8[%c0_75, %c0_76, %c0_77] : memref<2x8x256xf32, #tpu.memory_space<vmem>>, vector<1x8x256xf32>
    %149 = vector.shape_cast %148 : vector<1x8x256xf32> to vector<8x256xf32>
    %150 = vector.shape_cast %147 : vector<8x256xf32> to vector<1x8x256xf32>
    tpu.vector_store %arg8[%c0_75, %c0_76, %c0_77], %150 {strides = array<i32>} : memref<2x8x256xf32, #tpu.memory_space<vmem>>, vector<1x8x256xf32>,
    %151 = vector.extract_strided_slice %146 {offsets = [0, 256], sizes = [8, 256], strides = [1, 1]} : vector<8x512xf32> to vector<8x256xf32>
    %c1_78 = arith.constant 1 : index
    %c0_79 = arith.constant 0 : index
    %c0_80 = arith.constant 0 : index
    %152 = vector.load %arg8[%c1_78, %c0_79, %c0_80] : memref<2x8x256xf32, #tpu.memory_space<vmem>>, vector<1x8x256xf32>
    %153 = vector.shape_cast %152 : vector<1x8x256xf32> to vector<8x256xf32>
    %154 = vector.shape_cast %151 : vector<8x256xf32> to vector<1x8x256xf32>
    tpu.vector_store %arg8[%c1_78, %c0_79, %c0_80], %154 {strides = array<i32>} : memref<2x8x256xf32, #tpu.memory_space<vmem>>, vector<1x8x256xf32>,
    return
  }
  func.func @transform_0(%arg0: i32) -> (i32, i32, i32) {
    %c0_i32 = arith.constant 0 : i32
    %c0_i32_0 = arith.constant 0 : i32
    %c0_i32_1 = arith.constant 0 : i32
    return %arg0, %c0_i32, %c0_i32_0 : i32, i32, i32
  }
  func.func @transform_1(%arg0: i32) -> (i32, i32) {
    %c0_i32 = arith.constant 0 : i32
    %c0_i32_0 = arith.constant 0 : i32
    %c0_i32_1 = arith.constant 0 : i32
    return %c0_i32, %c0_i32_0 : i32, i32
  }
  func.func @transform_2(%arg0: i32) -> (i32, i32) {
    %c0_i32 = arith.constant 0 : i32
    %c0_i32_0 = arith.constant 0 : i32
    %c0_i32_1 = arith.constant 0 : i32
    return %c0_i32, %c0_i32_0 : i32, i32
  }
  func.func @transform_3(%arg0: i32) -> (i32, i32) {
    %c0_i32 = arith.constant 0 : i32
    %c0_i32_0 = arith.constant 0 : i32
    %c0_i32_1 = arith.constant 0 : i32
    return %c0_i32, %c0_i32_0 : i32, i32
  }
  func.func @transform_4(%arg0: i32) -> (i32, i32) {
    %c0_i32 = arith.constant 0 : i32
    %c0_i32_0 = arith.constant 0 : i32
    %c0_i32_1 = arith.constant 0 : i32
    return %c0_i32, %c0_i32_0 : i32, i32
  }
  func.func @transform_5(%arg0: i32) -> (i32, i32) {
    %c0_i32 = arith.constant 0 : i32
    %c0_i32_0 = arith.constant 0 : i32
    %c0_i32_1 = arith.constant 0 : i32
    return %c0_i32, %c0_i32_0 : i32, i32
  }
  func.func @transform_6(%arg0: i32) -> (i32, i32) {
    %c0_i32 = arith.constant 0 : i32
    %c0_i32_0 = arith.constant 0 : i32
    %c0_i32_1 = arith.constant 0 : i32
    return %c0_i32, %c0_i32_0 : i32, i32
  }
  func.func @transform_7(%arg0: i32) -> (i32, i32, i32) {
    %c0_i32 = arith.constant 0 : i32
    %c0_i32_0 = arith.constant 0 : i32
    %c0_i32_1 = arith.constant 0 : i32
    return %arg0, %c0_i32, %c0_i32_0 : i32, i32, i32
  }
}

</mosaic_0001>

<llo_original>
// kernel: tpu_custom_call.1
$region0: #{tpu_custom_call.1}
  #allocation0 [shape = 'u32[]', space=smem, size = 0x4, offset = 0x4, fixed_abs, tag = 'smem constant byte address 0x4 - core index']
  #allocation1 [shape = 'u32[144,128]{1,0:T(1,128)}', space=vmem, size = 0x12000, scoped, tag = 'internal scratch']
  %s0 = inlined_call_operand.hbm [shape: f32[4,8,256], index: 0, kind: input, shape index: {}]
  %s1 = inlined_call_operand.vmem [shape: f32[8,512], index: 1, kind: input, shape index: {}]
  %s2 = inlined_call_operand.hbm [shape: f32[16,14], index: 2, kind: input, shape index: {}]
  %s3 = inlined_call_operand.vmem [shape: bf16[16,8], index: 3, kind: input, shape index: {}]
  %s4 = inlined_call_operand.vmem [shape: bf16[8,16], index: 4, kind: input, shape index: {}]
  %s5 = inlined_call_operand.vmem [shape: f32[4,16], index: 5, kind: input, shape index: {}]
  %s6 = inlined_call_operand.vmem [shape: f32[16,4], index: 6, kind: input, shape index: {}]
  %s7 = inlined_call_operand.hbm [shape: f32[4,8,256], index: 7, kind: output, shape index: {}]
  %s8 = sld [smem:[#allocation0]]
  $region69: #{tpu_custom_call.1} parent=0
    _
  %s10 = ssub.s32 1, %s8
  %s11 = scalar_select 0, %s10, %s8
  $region1: #{tpu_custom_call.1} parent=0
    #allocation2 [shape = 'u8[32768]{0}', space=vmem, size = 0x8000, scoped, tag = 'input window, operand 0']
    #allocation3 [shape = 's32[2]{0}', space=sflag, size = 0x8, scoped, tag = 'scoped memory for tpu_custom_call.1']
    #allocation4 [shape = 's32[2]{0}', space=sflag, size = 0x8, scoped, tag = 'scoped memory for tpu_custom_call.1']
    #allocation5 [shape = 'u8[8192]{0}', space=vmem, size = 0x2000, scoped, tag = 'input window, operand 2, single buffered']
    #allocation6 [shape = 's32[1]{0}', space=sflag, size = 0x4, scoped, tag = 'scoped memory for tpu_custom_call.1']
    #allocation7 [shape = 'u8[32768]{0}', space=vmem, size = 0x8000, scoped, tag = 'output window, operand 0']
    %12 = vsyncpa [#allocation3], 0
    %s13 = scalar_lea.sflag [#allocation3], 1
    %14 = vsyncpa %s13, 0
    %15 = vsyncpa [#allocation6], 0
    %16 = vsyncpa [#allocation4], 0
    %s17 = scalar_lea.sflag [#allocation4], 1
    %18 = vsyncpa %s17, 0
    loop: start=0, step=1, limit=4
    $region2: #{tpu_custom_call.1} parent=1 // loop_pre_header
      _
    $region3: #{tpu_custom_call.1} parent=1 // loop_header
      %s20 = sphi 0, %s24
      %p21 = scmp.ge.s32.totalorder %s20, 4
      %s30 = sphi 0, %s32
      %s33 = sphi 0, %s30
      %s34 = sphi 0, %s33
      %s50 = sphi 0, %s34
      %s54 = sphi 0, %s54
      %s56 = sphi 0, %s54
      %s57 = sphi 0, %s56
      %s71 = sphi 0, %s57
      %s75 = sphi 0, %s75
      %s77 = sphi 0, %s75
      %s78 = sphi 0, %s77
      %s92 = sphi 0, %s78
      %s96 = sphi 0, %s96
      %s98 = sphi 0, %s96
      %s99 = sphi 0, %s98
      %s113 = sphi 0, %s99
      %s117 = sphi 0, %s117
      %s119 = sphi 0, %s117
      %s120 = sphi 0, %s119
      %s134 = sphi 0, %s120
      %s138 = sphi 0, %s138
      %s140 = sphi 0, %s138
      %s141 = sphi 0, %s140
      %s155 = sphi 0, %s141
      %s159 = sphi 0, %s159
      %s161 = sphi 0, %s159
      %s162 = sphi 0, %s161
      %s176 = sphi 0, %s162
      %s182 = sphi 0, %s184
      %s185 = sphi 0, %s182
      %s186 = sphi 0, %s185
      %s202 = sphi 0, %s186
    $region4: #{tpu_custom_call.1} parent=1 // loop_header_branch
      %23 = sbr.rel (%p21) target = $region8
    $region5: #{tpu_custom_call.1} parent=1 // loop_body
      %s25 = ssub.s32 %s20, 1
      %s26 = ssub.s32 %s20, 2
      %s27 = sadd.s32 %s20, 1
      %s28 = ssub.s32 %s20, %s27
      %p29 = scmp.eq.s32.totalorder %s28, 0
      %s31 = sadd.s32 %s30, 1
      %s32 = scalar_select %p29, %s30, %s31
      %p35 = pneg %p29
      %p36 = scmp.eq.s32.totalorder %s20, 1
      %p37 = por %p35, %p36
      %p38 = scmp.ne.s32.totalorder %s30, %s33
      %p39 = scmp.eq.s32.totalorder %s20, 0
      %p40 = por %p38, %p39
      %p41 = scmp.ne.s32.totalorder %s30, %s33
      %p42 = scmp.eq.s32.totalorder %s25, 1
      %p43 = por %p41, %p42
      %p44 = scmp.ne.s32.totalorder %s33, %s34
      %p45 = scmp.eq.s32.totalorder %s25, 0
      %p46 = por %p44, %p45
      %p47 = scmp.ne.s32.totalorder %s33, %s34
      %p48 = scmp.eq.s32.totalorder %s26, 1
      %p49 = por %p47, %p48
      %p51 = scmp.ne.s32.totalorder %s34, %s50
      %p52 = scmp.eq.s32.totalorder %s26, 0
      %p53 = por %p51, %p52
      %s55 = sadd.s32 %s54, 1
      %p58 = scmp.eq.s32.totalorder %s20, 1
      %p59 = scmp.ne.s32.totalorder %s54, %s56
      %p60 = scmp.eq.s32.totalorder %s20, 0
      %p61 = por %p59, %p60
      %p62 = scmp.ne.s32.totalorder %s54, %s56
      %p63 = scmp.eq.s32.totalorder %s25, 1
      %p64 = por %p62, %p63
      %p65 = scmp.ne.s32.totalorder %s56, %s57
      %p66 = scmp.eq.s32.totalorder %s25, 0
      %p67 = por %p65, %p66
      %p68 = scmp.ne.s32.totalorder %s56, %s57
      %p69 = scmp.eq.s32.totalorder %s26, 1
      %p70 = por %p68, %p69
      %p72 = scmp.ne.s32.totalorder %s57, %s71
      %p73 = scmp.eq.s32.totalorder %s26, 0
      %p74 = por %p72, %p73
      %s76 = sadd.s32 %s75, 1
      %p79 = scmp.eq.s32.totalorder %s20, 1
      %p80 = scmp.ne.s32.totalorder %s75, %s77
      %p81 = scmp.eq.s32.totalorder %s20, 0
      %p82 = por %p80, %p81
      %p83 = scmp.ne.s32.totalorder %s75, %s77
      %p84 = scmp.eq.s32.totalorder %s25, 1
      %p85 = por %p83, %p84
      %p86 = scmp.ne.s32.totalorder %s77, %s78
      %p87 = scmp.eq.s32.totalorder %s25, 0
      %p88 = por %p86, %p87
      %p89 = scmp.ne.s32.totalorder %s77, %s78
      %p90 = scmp.eq.s32.totalorder %s26, 1
      %p91 = por %p89, %p90
      %p93 = scmp.ne.s32.totalorder %s78, %s92
      %p94 = scmp.eq.s32.totalorder %s26, 0
      %p95 = por %p93, %p94
      %s97 = sadd.s32 %s96, 1
      %p100 = scmp.eq.s32.totalorder %s20, 1
      %p101 = scmp.ne.s32.totalorder %s96, %s98
      %p102 = scmp.eq.s32.totalorder %s20, 0
      %p103 = por %p101, %p102
      %p104 = scmp.ne.s32.totalorder %s96, %s98
      %p105 = scmp.eq.s32.totalorder %s25, 1
      %p106 = por %p104, %p105
      %p107 = scmp.ne.s32.totalorder %s98, %s99
      %p108 = scmp.eq.s32.totalorder %s25, 0
      %p109 = por %p107, %p108
      %p110 = scmp.ne.s32.totalorder %s98, %s99
      %p111 = scmp.eq.s32.totalorder %s26, 1
      %p112 = por %p110, %p111
      %p114 = scmp.ne.s32.totalorder %s99, %s113
      %p115 = scmp.eq.s32.totalorder %s26, 0
      %p116 = por %p114, %p115
      %s118 = sadd.s32 %s117, 1
      %p121 = scmp.eq.s32.totalorder %s20, 1
      %p122 = scmp.ne.s32.totalorder %s117, %s119
      %p123 = scmp.eq.s32.totalorder %s20, 0
      %p124 = por %p122, %p123
      %p125 = scmp.ne.s32.totalorder %s117, %s119
      %p126 = scmp.eq.s32.totalorder %s25, 1
      %p127 = por %p125, %p126
      %p128 = scmp.ne.s32.totalorder %s119, %s120
      %p129 = scmp.eq.s32.totalorder %s25, 0
      %p130 = por %p128, %p129
      %p131 = scmp.ne.s32.totalorder %s119, %s120
      %p132 = scmp.eq.s32.totalorder %s26, 1
      %p133 = por %p131, %p132
      %p135 = scmp.ne.s32.totalorder %s120, %s134
      %p136 = scmp.eq.s32.totalorder %s26, 0
      %p137 = por %p135, %p136
      %s139 = sadd.s32 %s138, 1
      %p142 = scmp.eq.s32.totalorder %s20, 1
      %p143 = scmp.ne.s32.totalorder %s138, %s140
      %p144 = scmp.eq.s32.totalorder %s20, 0
      %p145 = por %p143, %p144
      %p146 = scmp.ne.s32.totalorder %s138, %s140
      %p147 = scmp.eq.s32.totalorder %s25, 1
      %p148 = por %p146, %p147
      %p149 = scmp.ne.s32.totalorder %s140, %s141
      %p150 = scmp.eq.s32.totalorder %s25, 0
      %p151 = por %p149, %p150
      %p152 = scmp.ne.s32.totalorder %s140, %s141
      %p153 = scmp.eq.s32.totalorder %s26, 1
      %p154 = por %p152, %p153
      %p156 = scmp.ne.s32.totalorder %s141, %s155
      %p157 = scmp.eq.s32.totalorder %s26, 0
      %p158 = por %p156, %p157
      %s160 = sadd.s32 %s159, 1
      %p163 = scmp.eq.s32.totalorder %s20, 1
      %p164 = scmp.ne.s32.totalorder %s159, %s161
      %p165 = scmp.eq.s32.totalorder %s20, 0
      %p166 = por %p164, %p165
      %p167 = scmp.ne.s32.totalorder %s159, %s161
      %p168 = scmp.eq.s32.totalorder %s25, 1
      %p169 = por %p167, %p168
      %p170 = scmp.ne.s32.totalorder %s161, %s162
      %p171 = scmp.eq.s32.totalorder %s25, 0
      %p172 = por %p170, %p171
      %p173 = scmp.ne.s32.totalorder %s161, %s162
      %p174 = scmp.eq.s32.totalorder %s26, 1
      %p175 = por %p173, %p174
      %p177 = scmp.ne.s32.totalorder %s162, %s176
      %p178 = scmp.eq.s32.totalorder %s26, 0
      %p179 = por %p177, %p178
      %s180 = ssub.s32 %s20, %s27
      %p181 = scmp.eq.s32.totalorder %s180, 0
      %s183 = sadd.s32 %s182, 1
      %s184 = scalar_select %p181, %s182, %s183
      %p187 = pneg %p181
      %p188 = scmp.eq.s32.totalorder %s20, 1
      %p189 = por %p187, %p188
      %p190 = scmp.ne.s32.totalorder %s182, %s185
      %p191 = scmp.eq.s32.totalorder %s20, 0
      %p192 = por %p190, %p191
      %p193 = scmp.ne.s32.totalorder %s182, %s185
      %p194 = scmp.eq.s32.totalorder %s25, 1
      %p195 = por %p193, %p194
      %p196 = scmp.ne.s32.totalorder %s185, %s186
      %p197 = scmp.eq.s32.totalorder %s25, 0
      %p198 = por %p196, %p197
      %p199 = scmp.ne.s32.totalorder %s185, %s186
      %p200 = scmp.eq.s32.totalorder %s26, 1
      %p201 = por %p199, %p200
      %p203 = scmp.ne.s32.totalorder %s186, %s202
      %p204 = scmp.eq.s32.totalorder %s26, 0
      %p205 = por %p203, %p204
      %p206 = scmp.le.s32.totalorder 1, %s20
      %p207 = scmp.lt.s32.totalorder %s20, 3
      %p208 = pnand %p206, %p207
      %p209 = pneg %p208
      // Predicated region
      $region9: #{tpu_custom_call.1} parent=5 // pred_check
        _
      $region10: #{tpu_custom_call.1} parent=5 // pred_check_branch
        %211 = sbr.rel (%p208) target = $region12
      $region11: #{tpu_custom_call.1} parent=5 // pred_region
        %s212 = ssub.s32 %s20, 1
        // Predicated region
        $region13: #{tpu_custom_call.1} parent=11 // pred_check
          %p213 = pneg %p67
        $region14: #{tpu_custom_call.1} parent=11 // pred_check_branch
          %215 = sbr.rel (%p213) target = $region16
        $region15: #{tpu_custom_call.1} parent=11 // pred_region
          _
        $region16: #{tpu_custom_call.1} parent=11 // pred_fallthru
          _
        // Predicated region
        $region17: #{tpu_custom_call.1} parent=11 // pred_check
          %p216 = pneg %p88
        $region18: #{tpu_custom_call.1} parent=11 // pred_check_branch
          %218 = sbr.rel (%p216) target = $region20
        $region19: #{tpu_custom_call.1} parent=11 // pred_region
          %s220 = ssub.s32 256, 256
          %221 = vsyncadd [#allocation6], %s220
          %s222 = sshll.u32 [#allocation5], 4
          %s223 = int_to_ptr.vmem [resolvable:$true] %s222
          %228 = dma.hbm_to_vmem [thread:$0]  %s2, 256, %s223, [#allocation6], 128, 128, 8
        $region20: #{tpu_custom_call.1} parent=11 // pred_fallthru
          _
        // Predicated region
        $region21: #{tpu_custom_call.1} parent=11 // pred_check
          %p229 = pneg %p109
        $region22: #{tpu_custom_call.1} parent=11 // pred_check_branch
          %231 = sbr.rel (%p229) target = $region24
        $region23: #{tpu_custom_call.1} parent=11 // pred_region
          _
        $region24: #{tpu_custom_call.1} parent=11 // pred_fallthru
          _
        // Predicated region
        $region25: #{tpu_custom_call.1} parent=11 // pred_check
          %p232 = pneg %p130
        $region26: #{tpu_custom_call.1} parent=11 // pred_check_branch
          %234 = sbr.rel (%p232) target = $region28
        $region27: #{tpu_custom_call.1} parent=11 // pred_region
          _
        $region28: #{tpu_custom_call.1} parent=11 // pred_fallthru
          _
        // Predicated region
        $region29: #{tpu_custom_call.1} parent=11 // pred_check
          %p235 = pneg %p151
        $region30: #{tpu_custom_call.1} parent=11 // pred_check_branch
          %237 = sbr.rel (%p235) target = $region32
        $region31: #{tpu_custom_call.1} parent=11 // pred_region
          _
        $region32: #{tpu_custom_call.1} parent=11 // pred_fallthru
          _
        // Predicated region
        $region33: #{tpu_custom_call.1} parent=11 // pred_check
          %p238 = pneg %p172
        $region34: #{tpu_custom_call.1} parent=11 // pred_check_branch
          %240 = sbr.rel (%p238) target = $region36
        $region35: #{tpu_custom_call.1} parent=11 // pred_region
          _
        $region36: #{tpu_custom_call.1} parent=11 // pred_fallthru
          _
      $region12: #{tpu_custom_call.1} parent=5 // pred_fallthru
        _
      %p241 = scmp.lt.s32.totalorder %s20, 2
      // Predicated region
      $region37: #{tpu_custom_call.1} parent=5 // pred_check
        %p242 = pneg %p241
      $region38: #{tpu_custom_call.1} parent=5 // pred_check_branch
        %244 = sbr.rel (%p242) target = $region40
      $region39: #{tpu_custom_call.1} parent=5 // pred_region
        // Predicated region
        $region41: #{tpu_custom_call.1} parent=39 // pred_check
          %p245 = pneg %p40
        $region42: #{tpu_custom_call.1} parent=39 // pred_check_branch
          %247 = sbr.rel (%p245) target = $region44
        $region43: #{tpu_custom_call.1} parent=39 // pred_region
          %s248 = sand.u32 %s30, 1
          %s249 = scalar_lea.sflag [#allocation3], %s248
          %s250 = sand.u32 %s30, 1
          %s251 = smul.addr %s250, 32
          %s252 = scalar_lea.vmem [#allocation2], %s251
          %s253 = smul.u32 2, %s20
          %s255 = ssub.s32 512, 512
          %256 = vsyncadd %s249, %s255
          %s257 = smul.addr %s253, 2
          %s258 = smul.addr %s257, 128
          %s259 = scalar_lea.hbm %s0, %s258
          %s260 = sshll.u32 %s252, 4
          %s261 = int_to_ptr.vmem [resolvable:$true] %s260
          %266 = dma.hbm_to_vmem [thread:$0]  %s259, 512, %s261, %s249, 256, 256, 16
        $region44: #{tpu_custom_call.1} parent=39 // pred_fallthru
          _
      $region40: #{tpu_custom_call.1} parent=5 // pred_fallthru
        _
      %p267 = scmp.le.s32.totalorder 1, %s20
      %p268 = scmp.lt.s32.totalorder %s20, 3
      %p269 = pnand %p267, %p268
      %p270 = pneg %p269
      // Predicated region
      $region45: #{tpu_custom_call.1} parent=5 // pred_check
        _
      $region46: #{tpu_custom_call.1} parent=5 // pred_check_branch
        %272 = sbr.rel (%p269) target = $region48
      $region47: #{tpu_custom_call.1} parent=5 // pred_region
        %s273 = ssub.s32 %s20, 1
        %s274 = sand.u32 %s33, 1
        %s275 = scalar_lea.sflag [#allocation3], %s274
        %s276 = sand.u32 %s33, 1
        %s277 = smul.addr %s276, 32
        %s278 = scalar_lea.vmem [#allocation2], %s277
        // Predicated region
        $region49: #{tpu_custom_call.1} parent=47 // pred_check
          %p279 = pneg %p46
        $region50: #{tpu_custom_call.1} parent=47 // pred_check_branch
          %281 = sbr.rel (%p279) target = $region52
        $region51: #{tpu_custom_call.1} parent=47 // pred_region
          %282 = dma.done %s275, 512
        $region52: #{tpu_custom_call.1} parent=47 // pred_fallthru
          _
        // Predicated region
        $region53: #{tpu_custom_call.1} parent=47 // pred_check
          %p283 = pneg %p88
        $region54: #{tpu_custom_call.1} parent=47 // pred_check_branch
          %285 = sbr.rel (%p283) target = $region56
        $region55: #{tpu_custom_call.1} parent=47 // pred_region
          %286 = dma.done [#allocation6], 256
        $region56: #{tpu_custom_call.1} parent=47 // pred_fallthru
          _
        %s287 = sand.u32 %s33, 1
        %s288 = scalar_lea.sflag [#allocation3], %s287
        %s289 = sand.u32 %s33, 1
        %s290 = smul.addr %s289, 32
        %s291 = scalar_lea.vmem [#allocation2], %s290
        %p292 = pneg %p46
        %p293 = pneg %p43
        %p294 = pneg %p67
        %p295 = pneg %p64
        %p296 = pneg %p88
        %p297 = pneg %p85
        %p298 = pneg %p109
        %p299 = pneg %p106
        %p300 = pneg %p130
        %p301 = pneg %p127
        %p302 = pneg %p151
        %p303 = pneg %p148
        %p304 = pneg %p172
        %p305 = pneg %p169
        %p306 = pneg %p198
        %p307 = pneg %p195
        %s308 = sand.u32 %s185, 1
        %s309 = scalar_lea.sflag [#allocation4], %s308
        %s310 = sand.u32 %s185, 1
        %s311 = smul.addr %s310, 32
        %s312 = scalar_lea.vmem [#allocation7], %s311
        %s313 = smul.u32 2, %s25
        %s314 = smul.u32 2, %s25
        %v316 = vld [vmem:[%s278] sm:$0xff]
        %v317 = vld [vmem:[%s278 + $0x8] sm:$0xff]
        %s318 = scalar_lea.vmem %s278, 16 [#allocation2]
        %v319 = vld [vmem:[%s318] sm:$0xff]
        %v320 = vld [vmem:[%s318 + $0x8] sm:$0xff]
        %v321 = vld [vmem:[%s3] sm:$0xf]
        %v322 = vld [vmem:[%s3 + $0x4] sm:$0xf]
        %v323 = vpack.c.bf16 %v316, %v316
        %v324 = vpack.c.bf16 %v317, %v317
        %v325 = vpack.c.bf16 %v319, %v319
        %v326 = vpack.c.bf16 %v320, %v320
        %v327 = vld [vmem:[#allocation5] sm:$0xff]
        %v328 = vld [vmem:[#allocation5 + $0x8] sm:$0xff]
        %330 = vset.pattern.permute.xlu0 9
        %331 = vperm.xlu0 %330, %v327
        %v332 = vpop.permute.xlu0 %331
        %335 = vset.pattern.permute.xlu0 9
        %336 = vperm.xlu0 %335, %v328
        %v337 = vpop.permute.xlu0 %336
        %v341 = vunpack.c.l.b16 %v321
        %v342 = vunpack.c.l.b16 %v322
        %v343 = vpack.c.b16 %v342, %v341
        %vm344 = vcmask 64512
        %v346 = vsel %vm344, %v343, 0
        %vm348 = vcmask 1043456
        %v350 = vsel %vm348, %v323, 0
        %v353 = vsel %vm348, %v324, 0
        %v356 = vsel %vm348, %v325, 0
        %v359 = vsel %vm348, %v326, 0
        %361 = vmatprep.subr.bf16.mxu0 %v353
        %362 = vmatpush1.bf16.msra.mxu0 %v350
        %363 = vmatprep.subr.bf16.mxu0 0
        %364 = vmatpush1.bf16.msra.mxu0 0
        %365 = vmatprep.subr.bf16.mxu0 0
        %366 = vmatpush1.bf16.msra.mxu0 0
        %367 = vmatprep.subr.bf16.mxu0 0
        %368 = vmatpush1.bf16.msra.mxu0 0
        %369 = vmatprep.subr.bf16.mxu0 0
        %370 = vmatpush1.bf16.msra.mxu0 0
        %371 = vmatprep.subr.bf16.mxu0 0
        %372 = vmatpush1.bf16.msra.mxu0 0
        %373 = vmatprep.subr.bf16.mxu0 0
        %374 = vmatpush1.bf16.msra.mxu0 0
        %375 = vmatprep.subr.bf16.mxu0 0
        %376 = vmatpush1.bf16.msra.mxu0 0
        %377 = vmatprep.subr.bf16.mxu0 0
        %378 = vmatpush1.bf16.msra.mxu0 0
        %379 = vmatprep.subr.bf16.mxu0 0
        %380 = vmatpush1.bf16.msra.mxu0 0
        %381 = vmatprep.subr.bf16.mxu0 0
        %382 = vmatpush1.bf16.msra.mxu0 0
        %383 = vmatprep.subr.bf16.mxu0 0
        %384 = vmatpush1.bf16.msra.mxu0 0
        %385 = vmatprep.subr.bf16.mxu0 0
        %386 = vmatpush1.bf16.msra.mxu0 0
        %387 = vmatprep.subr.bf16.mxu0 0
        %388 = vmatpush1.bf16.msra.mxu0 0
        %389 = vmatprep.subr.bf16.mxu0 0
        %390 = vmatpush1.bf16.msra.mxu0 0
        %391 = vmatprep.subr.bf16.mxu0 0
        %392 = vmatpush1.bf16.msra.mxu0 0
        %393 = vmatprep.mubr.bf16.mxu0 0
        %394 = vmatmul.mubr.bf16.gmra.mrb[0].mxu0 %v346
        %v395 = vpop.f32.mrb[0].mxu0
        %v396 = vadd.f32 %v332, %v395
        %v397 = vpop.f32.mrb[0].mxu0
        %v398 = vadd.f32 %v332, %v397
        %v399 = vpop.f32.mrb[0].mxu0
        %v400 = vadd.f32 %v337, %v399
        %v401 = vpop.f32.mrb[0].mxu0
        %v402 = vadd.f32 %v337, %v401
        %403 = vdwg.mxu0
        %404 = vmatprep.subr.bf16.mxu0 %v359
        %405 = vmatpush1.bf16.msra.mxu0 %v356
        %406 = vmatprep.subr.bf16.mxu0 0
        %407 = vmatpush1.bf16.msra.mxu0 0
        %408 = vmatprep.subr.bf16.mxu0 0
        %409 = vmatpush1.bf16.msra.mxu0 0
        %410 = vmatprep.subr.bf16.mxu0 0
        %411 = vmatpush1.bf16.msra.mxu0 0
        %412 = vmatprep.subr.bf16.mxu0 0
        %413 = vmatpush1.bf16.msra.mxu0 0
        %414 = vmatprep.subr.bf16.mxu0 0
        %415 = vmatpush1.bf16.msra.mxu0 0
        %416 = vmatprep.subr.bf16.mxu0 0
        %417 = vmatpush1.bf16.msra.mxu0 0
        %418 = vmatprep.subr.bf16.mxu0 0
        %419 = vmatpush1.bf16.msra.mxu0 0
        %420 = vmatprep.subr.bf16.mxu0 0
        %421 = vmatpush1.bf16.msra.mxu0 0
        %422 = vmatprep.subr.bf16.mxu0 0
        %423 = vmatpush1.bf16.msra.mxu0 0
        %424 = vmatprep.subr.bf16.mxu0 0
        %425 = vmatpush1.bf16.msra.mxu0 0
        %426 = vmatprep.subr.bf16.mxu0 0
        %427 = vmatpush1.bf16.msra.mxu0 0
        %428 = vmatprep.subr.bf16.mxu0 0
        %429 = vmatpush1.bf16.msra.mxu0 0
        %430 = vmatprep.subr.bf16.mxu0 0
        %431 = vmatpush1.bf16.msra.mxu0 0
        %432 = vmatprep.subr.bf16.mxu0 0
        %433 = vmatpush1.bf16.msra.mxu0 0
        %434 = vmatprep.subr.bf16.mxu0 0
        %435 = vmatpush1.bf16.msra.mxu0 0
        %436 = vmatprep.mubr.bf16.mxu0 0
        %437 = vmatmul.mubr.bf16.gmra.mrb[0].mxu0 %v346
        %v438 = vpop.f32.mrb[0].mxu0
        %v439 = vadd.f32 %v332, %v438
        %v440 = vpop.f32.mrb[0].mxu0
        %v441 = vadd.f32 %v332, %v440
        %v442 = vpop.f32.mrb[0].mxu0
        %v443 = vadd.f32 %v337, %v442
        %v444 = vpop.f32.mrb[0].mxu0
        %v445 = vadd.f32 %v337, %v444
        %446 = vdwg.mxu0
        %v447 = vmax.f32 %v396, 0.0
        %v448 = vmax.f32 %v398, 0.0
        %v449 = vmax.f32 %v439, 0.0
        %v450 = vmax.f32 %v441, 0.0
        %v451 = vmax.f32 %v400, 0.0
        %v452 = vmax.f32 %v402, 0.0
        %v453 = vmax.f32 %v443, 0.0
        %v454 = vmax.f32 %v445, 0.0
        %455 = vset.pattern.permute.xlu0 4
        %456 = vperm.xlu0 %455, %v327
        %v457 = vpop.permute.xlu0 %456
        %459 = vset.pattern.permute.xlu0 4
        %460 = vperm.xlu0 %459, %v328
        %v461 = vpop.permute.xlu0 %460
        %v463 = vmul.f32 %v447, %v457
        %v464 = vmul.f32 %v448, %v457
        %v465 = vmul.f32 %v449, %v457
        %v466 = vmul.f32 %v450, %v457
        %v467 = vmul.f32 %v451, %v461
        %v468 = vmul.f32 %v452, %v461
        %v469 = vmul.f32 %v453, %v461
        %v470 = vmul.f32 %v454, %v461
        %471 = vrot.lane.b32.xlu0 %v447, 17
        %v472 = vpop.permute.xlu0 %471
        %473 = vrot.lane.b32.xlu0 %v451, 17
        %v474 = vpop.permute.xlu0 %473
        %475 = vrot.lane.b32.xlu0 %v448, 17
        %v476 = vpop.permute.xlu0 %475
        %477 = vrot.lane.b32.xlu0 %v452, 17
        %v478 = vpop.permute.xlu0 %477
        %479 = vrot.lane.b32.xlu0 %v449, 17
        %v480 = vpop.permute.xlu0 %479
        %481 = vrot.lane.b32.xlu0 %v453, 17
        %v482 = vpop.permute.xlu0 %481
        %483 = vrot.lane.b32.xlu0 %v450, 17
        %v484 = vpop.permute.xlu0 %483
        %485 = vrot.lane.b32.xlu0 %v454, 17
        %v486 = vpop.permute.xlu0 %485
        %v487 = vlaneseq
        %v488 = vand.u32 %v487, 127
        %vm489 = vcmp.lt.s32.totalorder %v488, 17
        %v490 = vsel %vm489, %v480, %v484
        %v491 = vsel %vm489, %v482, %v486
        %v492 = vsel %vm489, %v476, %v480
        %v493 = vsel %vm489, %v478, %v482
        %v494 = vsel %vm489, %v472, %v476
        %v495 = vsel %vm489, %v474, %v478
        %v496 = vsel %vm489, %v484, %v472
        %v497 = vsel %vm489, %v486, %v474
        %v498 = vld [vmem:[%s1] ss:$8 sm:$0xf]
        %v500 = vlaneseq
        %v501 = vshrl.u32 %v500, 7
        %v502 = vsub.s32 0, %v501
        %v503 = vrot.slane %v498, %v502
        %v504 = vlaneseq
        %v505 = vshrl.u32 %v504, 7
        %v506 = vsub.s32 1, %v505
        %v507 = vrot.slane %v498, %v506
        %v508 = vlaneseq
        %v509 = vshrl.u32 %v508, 7
        %v510 = vsub.s32 2, %v509
        %v511 = vrot.slane %v498, %v510
        %v512 = vlaneseq
        %v513 = vshrl.u32 %v512, 7
        %v514 = vsub.s32 3, %v513
        %v515 = vrot.slane %v498, %v514
        %v520 = vmul.f32 %v496, %v503
        %v521 = vmul.f32 %v494, %v507
        %v522 = vmul.f32 %v492, %v511
        %v523 = vmul.f32 %v490, %v515
        %v524 = vmul.f32 %v497, %v503
        %v525 = vmul.f32 %v495, %v507
        %v526 = vmul.f32 %v493, %v511
        %v527 = vmul.f32 %v491, %v515
        %528 = vset.pattern.permute.xlu0 0
        %529 = vperm.xlu0 %528, %v327
        %v530 = vpop.permute.xlu0 %529
        %532 = vset.pattern.permute.xlu0 0
        %533 = vperm.xlu0 %532, %v328
        %v534 = vpop.permute.xlu0 %533
        %v536 = vmul.f32 %v520, %v530
        %v537 = vmul.f32 %v521, %v530
        %v538 = vmul.f32 %v522, %v530
        %v539 = vmul.f32 %v523, %v530
        %v540 = vmul.f32 %v524, %v534
        %v541 = vmul.f32 %v525, %v534
        %v542 = vmul.f32 %v526, %v534
        %v543 = vmul.f32 %v527, %v534
        %544 = vrot.lane.b32.xlu0 %v447, 16
        %v545 = vpop.permute.xlu0 %544
        %546 = vrot.lane.b32.xlu0 %v451, 16
        %v547 = vpop.permute.xlu0 %546
        %548 = vrot.lane.b32.xlu0 %v448, 16
        %v549 = vpop.permute.xlu0 %548
        %550 = vrot.lane.b32.xlu0 %v452, 16
        %v551 = vpop.permute.xlu0 %550
        %552 = vrot.lane.b32.xlu0 %v449, 16
        %v553 = vpop.permute.xlu0 %552
        %554 = vrot.lane.b32.xlu0 %v453, 16
        %v555 = vpop.permute.xlu0 %554
        %556 = vrot.lane.b32.xlu0 %v450, 16
        %v557 = vpop.permute.xlu0 %556
        %558 = vrot.lane.b32.xlu0 %v454, 16
        %v559 = vpop.permute.xlu0 %558
        %vm560 = vcmp.lt.s32.totalorder %v488, 16
        %v561 = vsel %vm560, %v553, %v557
        %v562 = vsel %vm560, %v555, %v559
        %v563 = vsel %vm560, %v549, %v553
        %v564 = vsel %vm560, %v551, %v555
        %v565 = vsel %vm560, %v545, %v549
        %v566 = vsel %vm560, %v547, %v551
        %v567 = vsel %vm560, %v557, %v545
        %v568 = vsel %vm560, %v559, %v547
        %s569 = scalar_lea.vmem %s1, 1
        %v570 = vld [vmem:[%s569] ss:$8 sm:$0xf]
        %v572 = vlaneseq
        %v573 = vshrl.u32 %v572, 7
        %v574 = vsub.s32 0, %v573
        %v575 = vrot.slane %v570, %v574
        %v576 = vlaneseq
        %v577 = vshrl.u32 %v576, 7
        %v578 = vsub.s32 1, %v577
        %v579 = vrot.slane %v570, %v578
        %v580 = vlaneseq
        %v581 = vshrl.u32 %v580, 7
        %v582 = vsub.s32 2, %v581
        %v583 = vrot.slane %v570, %v582
        %v584 = vlaneseq
        %v585 = vshrl.u32 %v584, 7
        %v586 = vsub.s32 3, %v585
        %v587 = vrot.slane %v570, %v586
        %v592 = vmul.f32 %v567, %v575
        %v593 = vmul.f32 %v565, %v579
        %v594 = vmul.f32 %v563, %v583
        %v595 = vmul.f32 %v561, %v587
        %v596 = vmul.f32 %v568, %v575
        %v597 = vmul.f32 %v566, %v579
        %v598 = vmul.f32 %v564, %v583
        %v599 = vmul.f32 %v562, %v587
        %600 = vset.pattern.permute.xlu0 1
        %601 = vperm.xlu0 %600, %v327
        %v602 = vpop.permute.xlu0 %601
        %604 = vset.pattern.permute.xlu0 1
        %605 = vperm.xlu0 %604, %v328
        %v606 = vpop.permute.xlu0 %605
        %v608 = vmul.f32 %v592, %v602
        %v609 = vmul.f32 %v593, %v602
        %v610 = vmul.f32 %v594, %v602
        %v611 = vmul.f32 %v595, %v602
        %v612 = vmul.f32 %v596, %v606
        %v613 = vmul.f32 %v597, %v606
        %v614 = vmul.f32 %v598, %v606
        %v615 = vmul.f32 %v599, %v606
        %616 = vrot.lane.b32.xlu0 %v447, 15
        %v617 = vpop.permute.xlu0 %616
        %618 = vrot.lane.b32.xlu0 %v451, 15
        %v619 = vpop.permute.xlu0 %618
        %620 = vrot.lane.b32.xlu0 %v448, 15
        %v621 = vpop.permute.xlu0 %620
        %622 = vrot.lane.b32.xlu0 %v452, 15
        %v623 = vpop.permute.xlu0 %622
        %624 = vrot.lane.b32.xlu0 %v449, 15
        %v625 = vpop.permute.xlu0 %624
        %626 = vrot.lane.b32.xlu0 %v453, 15
        %v627 = vpop.permute.xlu0 %626
        %628 = vrot.lane.b32.xlu0 %v450, 15
        %v629 = vpop.permute.xlu0 %628
        %630 = vrot.lane.b32.xlu0 %v454, 15
        %v631 = vpop.permute.xlu0 %630
        %vm632 = vcmp.lt.s32.totalorder %v488, 15
        %v633 = vsel %vm632, %v625, %v629
        %v634 = vsel %vm632, %v627, %v631
        %v635 = vsel %vm632, %v621, %v625
        %v636 = vsel %vm632, %v623, %v627
        %v637 = vsel %vm632, %v617, %v621
        %v638 = vsel %vm632, %v619, %v623
        %v639 = vsel %vm632, %v629, %v617
        %v640 = vsel %vm632, %v631, %v619
        %s641 = scalar_lea.vmem %s1, 2
        %v642 = vld [vmem:[%s641] ss:$8 sm:$0xf]
        %v644 = vlaneseq
        %v645 = vshrl.u32 %v644, 7
        %v646 = vsub.s32 0, %v645
        %v647 = vrot.slane %v642, %v646
        %v648 = vlaneseq
        %v649 = vshrl.u32 %v648, 7
        %v650 = vsub.s32 1, %v649
        %v651 = vrot.slane %v642, %v650
        %v652 = vlaneseq
        %v653 = vshrl.u32 %v652, 7
        %v654 = vsub.s32 2, %v653
        %v655 = vrot.slane %v642, %v654
        %v656 = vlaneseq
        %v657 = vshrl.u32 %v656, 7
        %v658 = vsub.s32 3, %v657
        %v659 = vrot.slane %v642, %v658
        %v664 = vmul.f32 %v639, %v647
        %v665 = vmul.f32 %v637, %v651
        %v666 = vmul.f32 %v635, %v655
        %v667 = vmul.f32 %v633, %v659
        %v668 = vmul.f32 %v640, %v647
        %v669 = vmul.f32 %v638, %v651
        %v670 = vmul.f32 %v636, %v655
        %v671 = vmul.f32 %v634, %v659
        %672 = vset.pattern.permute.xlu0 2
        %673 = vperm.xlu0 %672, %v327
        %v674 = vpop.permute.xlu0 %673
        %676 = vset.pattern.permute.xlu0 2
        %677 = vperm.xlu0 %676, %v328
        %v678 = vpop.permute.xlu0 %677
        %v680 = vmul.f32 %v664, %v674
        %v681 = vmul.f32 %v665, %v674
        %v682 = vmul.f32 %v666, %v674
        %v683 = vmul.f32 %v667, %v674
        %v684 = vmul.f32 %v668, %v678
        %v685 = vmul.f32 %v669, %v678
        %v686 = vmul.f32 %v670, %v678
        %v687 = vmul.f32 %v671, %v678
        %688 = vrot.lane.b32.xlu0 %v447, 1
        %v689 = vpop.permute.xlu0 %688
        %690 = vrot.lane.b32.xlu0 %v451, 1
        %v691 = vpop.permute.xlu0 %690
        %692 = vrot.lane.b32.xlu0 %v448, 1
        %v693 = vpop.permute.xlu0 %692
        %694 = vrot.lane.b32.xlu0 %v452, 1
        %v695 = vpop.permute.xlu0 %694
        %696 = vrot.lane.b32.xlu0 %v449, 1
        %v697 = vpop.permute.xlu0 %696
        %698 = vrot.lane.b32.xlu0 %v453, 1
        %v699 = vpop.permute.xlu0 %698
        %700 = vrot.lane.b32.xlu0 %v450, 1
        %v701 = vpop.permute.xlu0 %700
        %702 = vrot.lane.b32.xlu0 %v454, 1
        %v703 = vpop.permute.xlu0 %702
        %vm704 = vcmp.lt.s32.totalorder %v488, 1
        %v705 = vsel %vm704, %v697, %v701
        %v706 = vsel %vm704, %v699, %v703
        %v707 = vsel %vm704, %v693, %v697
        %v708 = vsel %vm704, %v695, %v699
        %v709 = vsel %vm704, %v689, %v693
        %v710 = vsel %vm704, %v691, %v695
        %v711 = vsel %vm704, %v701, %v689
        %v712 = vsel %vm704, %v703, %v691
        %s713 = scalar_lea.vmem %s1, 3
        %v714 = vld [vmem:[%s713] ss:$8 sm:$0xf]
        %v716 = vlaneseq
        %v717 = vshrl.u32 %v716, 7
        %v718 = vsub.s32 0, %v717
        %v719 = vrot.slane %v714, %v718
        %v720 = vlaneseq
        %v721 = vshrl.u32 %v720, 7
        %v722 = vsub.s32 1, %v721
        %v723 = vrot.slane %v714, %v722
        %v724 = vlaneseq
        %v725 = vshrl.u32 %v724, 7
        %v726 = vsub.s32 2, %v725
        %v727 = vrot.slane %v714, %v726
        %v728 = vlaneseq
        %v729 = vshrl.u32 %v728, 7
        %v730 = vsub.s32 3, %v729
        %v731 = vrot.slane %v714, %v730
        %v736 = vmul.f32 %v711, %v719
        %v737 = vmul.f32 %v709, %v723
        %v738 = vmul.f32 %v707, %v727
        %v739 = vmul.f32 %v705, %v731
        %v740 = vmul.f32 %v712, %v719
        %v741 = vmul.f32 %v710, %v723
        %v742 = vmul.f32 %v708, %v727
        %v743 = vmul.f32 %v706, %v731
        %744 = vset.pattern.permute.xlu0 3
        %745 = vperm.xlu0 %744, %v327
        %v746 = vpop.permute.xlu0 %745
        %748 = vset.pattern.permute.xlu0 3
        %749 = vperm.xlu0 %748, %v328
        %v750 = vpop.permute.xlu0 %749
        %v752 = vmul.f32 %v736, %v746
        %v753 = vmul.f32 %v737, %v746
        %v754 = vmul.f32 %v738, %v746
        %v755 = vmul.f32 %v739, %v746
        %v756 = vmul.f32 %v740, %v750
        %v757 = vmul.f32 %v741, %v750
        %v758 = vmul.f32 %v742, %v750
        %v759 = vmul.f32 %v743, %v750
        %760 = vrot.lane.b32.xlu0 %v447, 127
        %v761 = vpop.permute.xlu0 %760
        %762 = vrot.lane.b32.xlu0 %v451, 127
        %v763 = vpop.permute.xlu0 %762
        %764 = vrot.lane.b32.xlu0 %v448, 127
        %v765 = vpop.permute.xlu0 %764
        %766 = vrot.lane.b32.xlu0 %v452, 127
        %v767 = vpop.permute.xlu0 %766
        %768 = vrot.lane.b32.xlu0 %v449, 127
        %v769 = vpop.permute.xlu0 %768
        %770 = vrot.lane.b32.xlu0 %v453, 127
        %v771 = vpop.permute.xlu0 %770
        %772 = vrot.lane.b32.xlu0 %v450, 127
        %v773 = vpop.permute.xlu0 %772
        %774 = vrot.lane.b32.xlu0 %v454, 127
        %v775 = vpop.permute.xlu0 %774
        %vm776 = vcmp.lt.s32.totalorder %v488, 127
        %v777 = vsel %vm776, %v769, %v773
        %v778 = vsel %vm776, %v771, %v775
        %v779 = vsel %vm776, %v765, %v769
        %v780 = vsel %vm776, %v767, %v771
        %v781 = vsel %vm776, %v761, %v765
        %v782 = vsel %vm776, %v763, %v767
        %v783 = vsel %vm776, %v773, %v761
        %v784 = vsel %vm776, %v775, %v763
        %s785 = scalar_lea.vmem %s1, 4
        %v786 = vld [vmem:[%s785] ss:$8 sm:$0xf]
        %v788 = vlaneseq
        %v789 = vshrl.u32 %v788, 7
        %v790 = vsub.s32 0, %v789
        %v791 = vrot.slane %v786, %v790
        %v792 = vlaneseq
        %v793 = vshrl.u32 %v792, 7
        %v794 = vsub.s32 1, %v793
        %v795 = vrot.slane %v786, %v794
        %v796 = vlaneseq
        %v797 = vshrl.u32 %v796, 7
        %v798 = vsub.s32 2, %v797
        %v799 = vrot.slane %v786, %v798
        %v800 = vlaneseq
        %v801 = vshrl.u32 %v800, 7
        %v802 = vsub.s32 3, %v801
        %v803 = vrot.slane %v786, %v802
        %v808 = vmul.f32 %v781, %v791
        %v809 = vmul.f32 %v779, %v795
        %v810 = vmul.f32 %v777, %v799
        %v811 = vmul.f32 %v783, %v803
        %v812 = vmul.f32 %v782, %v791
        %v813 = vmul.f32 %v780, %v795
        %v814 = vmul.f32 %v778, %v799
        %v815 = vmul.f32 %v784, %v803
        %816 = vset.pattern.permute.xlu0 5
        %817 = vperm.xlu0 %816, %v327
        %v818 = vpop.permute.xlu0 %817
        %820 = vset.pattern.permute.xlu0 5
        %821 = vperm.xlu0 %820, %v328
        %v822 = vpop.permute.xlu0 %821
        %v824 = vmul.f32 %v808, %v818
        %v825 = vmul.f32 %v809, %v818
        %v826 = vmul.f32 %v810, %v818
        %v827 = vmul.f32 %v811, %v818
        %v828 = vmul.f32 %v812, %v822
        %v829 = vmul.f32 %v813, %v822
        %v830 = vmul.f32 %v814, %v822
        %v831 = vmul.f32 %v815, %v822
        %832 = vrot.lane.b32.xlu0 %v447, 113
        %v833 = vpop.permute.xlu0 %832
        %834 = vrot.lane.b32.xlu0 %v451, 113
        %v835 = vpop.permute.xlu0 %834
        %836 = vrot.lane.b32.xlu0 %v448, 113
        %v837 = vpop.permute.xlu0 %836
        %838 = vrot.lane.b32.xlu0 %v452, 113
        %v839 = vpop.permute.xlu0 %838
        %840 = vrot.lane.b32.xlu0 %v449, 113
        %v841 = vpop.permute.xlu0 %840
        %842 = vrot.lane.b32.xlu0 %v453, 113
        %v843 = vpop.permute.xlu0 %842
        %844 = vrot.lane.b32.xlu0 %v450, 113
        %v845 = vpop.permute.xlu0 %844
        %846 = vrot.lane.b32.xlu0 %v454, 113
        %v847 = vpop.permute.xlu0 %846
        %vm848 = vcmp.lt.s32.totalorder %v488, 113
        %v849 = vsel %vm848, %v841, %v845
        %v850 = vsel %vm848, %v843, %v847
        %v851 = vsel %vm848, %v837, %v841
        %v852 = vsel %vm848, %v839, %v843
        %v853 = vsel %vm848, %v833, %v837
        %v854 = vsel %vm848, %v835, %v839
        %v855 = vsel %vm848, %v845, %v833
        %v856 = vsel %vm848, %v847, %v835
        %s857 = scalar_lea.vmem %s1, 5
        %v858 = vld [vmem:[%s857] ss:$8 sm:$0xf]
        %v860 = vlaneseq
        %v861 = vshrl.u32 %v860, 7
        %v862 = vsub.s32 0, %v861
        %v863 = vrot.slane %v858, %v862
        %v864 = vlaneseq
        %v865 = vshrl.u32 %v864, 7
        %v866 = vsub.s32 1, %v865
        %v867 = vrot.slane %v858, %v866
        %v868 = vlaneseq
        %v869 = vshrl.u32 %v868, 7
        %v870 = vsub.s32 2, %v869
        %v871 = vrot.slane %v858, %v870
        %v872 = vlaneseq
        %v873 = vshrl.u32 %v872, 7
        %v874 = vsub.s32 3, %v873
        %v875 = vrot.slane %v858, %v874
        %v880 = vmul.f32 %v853, %v863
        %v881 = vmul.f32 %v851, %v867
        %v882 = vmul.f32 %v849, %v871
        %v883 = vmul.f32 %v855, %v875
        %v884 = vmul.f32 %v854, %v863
        %v885 = vmul.f32 %v852, %v867
        %v886 = vmul.f32 %v850, %v871
        %v887 = vmul.f32 %v856, %v875
        %888 = vset.pattern.permute.xlu0 6
        %889 = vperm.xlu0 %888, %v327
        %v890 = vpop.permute.xlu0 %889
        %892 = vset.pattern.permute.xlu0 6
        %893 = vperm.xlu0 %892, %v328
        %v894 = vpop.permute.xlu0 %893
        %v896 = vmul.f32 %v880, %v890
        %v897 = vmul.f32 %v881, %v890
        %v898 = vmul.f32 %v882, %v890
        %v899 = vmul.f32 %v883, %v890
        %v900 = vmul.f32 %v884, %v894
        %v901 = vmul.f32 %v885, %v894
        %v902 = vmul.f32 %v886, %v894
        %v903 = vmul.f32 %v887, %v894
        %904 = vrot.lane.b32.xlu0 %v447, 112
        %v905 = vpop.permute.xlu0 %904
        %906 = vrot.lane.b32.xlu0 %v451, 112
        %v907 = vpop.permute.xlu0 %906
        %908 = vrot.lane.b32.xlu0 %v448, 112
        %v909 = vpop.permute.xlu0 %908
        %910 = vrot.lane.b32.xlu0 %v452, 112
        %v911 = vpop.permute.xlu0 %910
        %912 = vrot.lane.b32.xlu0 %v449, 112
        %v913 = vpop.permute.xlu0 %912
        %914 = vrot.lane.b32.xlu0 %v453, 112
        %v915 = vpop.permute.xlu0 %914
        %916 = vrot.lane.b32.xlu0 %v450, 112
        %v917 = vpop.permute.xlu0 %916
        %918 = vrot.lane.b32.xlu0 %v454, 112
        %v919 = vpop.permute.xlu0 %918
        %vm920 = vcmp.lt.s32.totalorder %v488, 112
        %v921 = vsel %vm920, %v913, %v917
        %v922 = vsel %vm920, %v915, %v919
        %v923 = vsel %vm920, %v909, %v913
        %v924 = vsel %vm920, %v911, %v915
        %v925 = vsel %vm920, %v905, %v909
        %v926 = vsel %vm920, %v907, %v911
        %v927 = vsel %vm920, %v917, %v905
        %v928 = vsel %vm920, %v919, %v907
        %s929 = scalar_lea.vmem %s1, 6
        %v930 = vld [vmem:[%s929] ss:$8 sm:$0xf]
        %v932 = vlaneseq
        %v933 = vshrl.u32 %v932, 7
        %v934 = vsub.s32 0, %v933
        %v935 = vrot.slane %v930, %v934
        %v936 = vlaneseq
        %v937 = vshrl.u32 %v936, 7
        %v938 = vsub.s32 1, %v937
        %v939 = vrot.slane %v930, %v938
        %v940 = vlaneseq
        %v941 = vshrl.u32 %v940, 7
        %v942 = vsub.s32 2, %v941
        %v943 = vrot.slane %v930, %v942
        %v944 = vlaneseq
        %v945 = vshrl.u32 %v944, 7
        %v946 = vsub.s32 3, %v945
        %v947 = vrot.slane %v930, %v946
        %v952 = vmul.f32 %v925, %v935
        %v953 = vmul.f32 %v923, %v939
        %v954 = vmul.f32 %v921, %v943
        %v955 = vmul.f32 %v927, %v947
        %v956 = vmul.f32 %v926, %v935
        %v957 = vmul.f32 %v924, %v939
        %v958 = vmul.f32 %v922, %v943
        %v959 = vmul.f32 %v928, %v947
        %960 = vset.pattern.permute.xlu0 7
        %961 = vperm.xlu0 %960, %v327
        %v962 = vpop.permute.xlu0 %961
        %964 = vset.pattern.permute.xlu0 7
        %965 = vperm.xlu0 %964, %v328
        %v966 = vpop.permute.xlu0 %965
        %v968 = vmul.f32 %v952, %v962
        %v969 = vmul.f32 %v953, %v962
        %v970 = vmul.f32 %v954, %v962
        %v971 = vmul.f32 %v955, %v962
        %v972 = vmul.f32 %v956, %v966
        %v973 = vmul.f32 %v957, %v966
        %v974 = vmul.f32 %v958, %v966
        %v975 = vmul.f32 %v959, %v966
        %976 = vrot.lane.b32.xlu0 %v447, 111
        %v977 = vpop.permute.xlu0 %976
        %978 = vrot.lane.b32.xlu0 %v451, 111
        %v979 = vpop.permute.xlu0 %978
        %980 = vrot.lane.b32.xlu0 %v448, 111
        %v981 = vpop.permute.xlu0 %980
        %982 = vrot.lane.b32.xlu0 %v452, 111
        %v983 = vpop.permute.xlu0 %982
        %984 = vrot.lane.b32.xlu0 %v449, 111
        %v985 = vpop.permute.xlu0 %984
        %986 = vrot.lane.b32.xlu0 %v453, 111
        %v987 = vpop.permute.xlu0 %986
        %988 = vrot.lane.b32.xlu0 %v450, 111
        %v989 = vpop.permute.xlu0 %988
        %990 = vrot.lane.b32.xlu0 %v454, 111
        %v991 = vpop.permute.xlu0 %990
        %vm992 = vcmp.lt.s32.totalorder %v488, 111
        %v993 = vsel %vm992, %v985, %v989
        %v994 = vsel %vm992, %v987, %v991
        %v995 = vsel %vm992, %v981, %v985
        %v996 = vsel %vm992, %v983, %v987
        %v997 = vsel %vm992, %v977, %v981
        %v998 = vsel %vm992, %v979, %v983
        %v999 = vsel %vm992, %v989, %v977
        %v1000 = vsel %vm992, %v991, %v979
        %s1001 = scalar_lea.vmem %s1, 7
        %v1002 = vld [vmem:[%s1001] ss:$8 sm:$0xf]
        %v1004 = vlaneseq
        %v1005 = vshrl.u32 %v1004, 7
        %v1006 = vsub.s32 0, %v1005
        %v1007 = vrot.slane %v1002, %v1006
        %v1008 = vlaneseq
        %v1009 = vshrl.u32 %v1008, 7
        %v1010 = vsub.s32 1, %v1009
        %v1011 = vrot.slane %v1002, %v1010
        %v1012 = vlaneseq
        %v1013 = vshrl.u32 %v1012, 7
        %v1014 = vsub.s32 2, %v1013
        %v1015 = vrot.slane %v1002, %v1014
        %v1016 = vlaneseq
        %v1017 = vshrl.u32 %v1016, 7
        %v1018 = vsub.s32 3, %v1017
        %v1019 = vrot.slane %v1002, %v1018
        %v1024 = vmul.f32 %v997, %v1007
        %v1025 = vmul.f32 %v995, %v1011
        %v1026 = vmul.f32 %v993, %v1015
        %v1027 = vmul.f32 %v999, %v1019
        %v1028 = vmul.f32 %v998, %v1007
        %v1029 = vmul.f32 %v996, %v1011
        %v1030 = vmul.f32 %v994, %v1015
        %v1031 = vmul.f32 %v1000, %v1019
        %1032 = vset.pattern.permute.xlu0 8
        %1033 = vperm.xlu0 %1032, %v327
        %v1034 = vpop.permute.xlu0 %1033
        %1036 = vset.pattern.permute.xlu0 8
        %1037 = vperm.xlu0 %1036, %v328
        %v1038 = vpop.permute.xlu0 %1037
        %v1040 = vmul.f32 %v1024, %v1034
        %v1041 = vmul.f32 %v1025, %v1034
        %v1042 = vmul.f32 %v1026, %v1034
        %v1043 = vmul.f32 %v1027, %v1034
        %v1044 = vmul.f32 %v1028, %v1038
        %v1045 = vmul.f32 %v1029, %v1038
        %v1046 = vmul.f32 %v1030, %v1038
        %v1047 = vmul.f32 %v1031, %v1038
        %v1048 = vadd.f32 %v463, %v536
        %v1049 = vadd.f32 %v464, %v537
        %v1050 = vadd.f32 %v465, %v538
        %v1051 = vadd.f32 %v466, %v539
        %v1052 = vadd.f32 %v467, %v540
        %v1053 = vadd.f32 %v468, %v541
        %v1054 = vadd.f32 %v469, %v542
        %v1055 = vadd.f32 %v470, %v543
        %v1056 = vadd.f32 %v608, %v680
        %v1057 = vadd.f32 %v609, %v681
        %v1058 = vadd.f32 %v610, %v682
        %v1059 = vadd.f32 %v611, %v683
        %v1060 = vadd.f32 %v612, %v684
        %v1061 = vadd.f32 %v613, %v685
        %v1062 = vadd.f32 %v614, %v686
        %v1063 = vadd.f32 %v615, %v687
        %v1064 = vadd.f32 %v752, %v824
        %v1065 = vadd.f32 %v753, %v825
        %v1066 = vadd.f32 %v754, %v826
        %v1067 = vadd.f32 %v755, %v827
        %v1068 = vadd.f32 %v756, %v828
        %v1069 = vadd.f32 %v757, %v829
        %v1070 = vadd.f32 %v758, %v830
        %v1071 = vadd.f32 %v759, %v831
        %v1072 = vadd.f32 %v896, %v968
        %v1073 = vadd.f32 %v897, %v969
        %v1074 = vadd.f32 %v898, %v970
        %v1075 = vadd.f32 %v899, %v971
        %v1076 = vadd.f32 %v900, %v972
        %v1077 = vadd.f32 %v901, %v973
        %v1078 = vadd.f32 %v902, %v974
        %v1079 = vadd.f32 %v903, %v975
        %v1080 = vadd.f32 %v1048, %v1056
        %v1081 = vadd.f32 %v1049, %v1057
        %v1082 = vadd.f32 %v1050, %v1058
        %v1083 = vadd.f32 %v1051, %v1059
        %v1084 = vadd.f32 %v1052, %v1060
        %v1085 = vadd.f32 %v1053, %v1061
        %v1086 = vadd.f32 %v1054, %v1062
        %v1087 = vadd.f32 %v1055, %v1063
        %v1088 = vadd.f32 %v1064, %v1072
        %v1089 = vadd.f32 %v1065, %v1073
        %v1090 = vadd.f32 %v1066, %v1074
        %v1091 = vadd.f32 %v1067, %v1075
        %v1092 = vadd.f32 %v1068, %v1076
        %v1093 = vadd.f32 %v1069, %v1077
        %v1094 = vadd.f32 %v1070, %v1078
        %v1095 = vadd.f32 %v1071, %v1079
        %v1096 = vadd.f32 %v1080, %v1088
        %v1097 = vadd.f32 %v1081, %v1089
        %v1098 = vadd.f32 %v1082, %v1090
        %v1099 = vadd.f32 %v1083, %v1091
        %v1100 = vadd.f32 %v1084, %v1092
        %v1101 = vadd.f32 %v1085, %v1093
        %v1102 = vadd.f32 %v1086, %v1094
        %v1103 = vadd.f32 %v1087, %v1095
        %v1104 = vadd.f32 %v1096, %v1040
        %v1105 = vadd.f32 %v1097, %v1041
        %v1106 = vadd.f32 %v1098, %v1042
        %v1107 = vadd.f32 %v1099, %v1043
        %v1108 = vadd.f32 %v1100, %v1044
        %v1109 = vadd.f32 %v1101, %v1045
        %v1110 = vadd.f32 %v1102, %v1046
        %v1111 = vadd.f32 %v1103, %v1047
        %1112 = vset.pattern.permute.xlu0 10
        %1113 = vperm.xlu0 %1112, %v327
        %v1114 = vpop.permute.xlu0 %1113
        %1116 = vset.pattern.permute.xlu0 10
        %1117 = vperm.xlu0 %1116, %v328
        %v1118 = vpop.permute.xlu0 %1117
        %v1120 = vadd.f32 %v1104, %v1114
        %v1121 = vadd.f32 %v1105, %v1114
        %v1122 = vadd.f32 %v1106, %v1114
        %v1123 = vadd.f32 %v1107, %v1114
        %v1124 = vadd.f32 %v1108, %v1118
        %v1125 = vadd.f32 %v1109, %v1118
        %v1126 = vadd.f32 %v1110, %v1118
        %v1127 = vadd.f32 %v1111, %v1118
        %v1128 = vmax.f32 %v1120, 0.0
        %v1129 = vmax.f32 %v1121, 0.0
        %v1130 = vmax.f32 %v1122, 0.0
        %v1131 = vmax.f32 %v1123, 0.0
        %v1132 = vmax.f32 %v1124, 0.0
        %v1133 = vmax.f32 %v1125, 0.0
        %v1134 = vmax.f32 %v1126, 0.0
        %v1135 = vmax.f32 %v1127, 0.0
        %v1136 = vadd.f32 %v1128, %v1129
        %1137 = vadd.xlane.f32.xlu0 %v1136
        %v1138 = vpop.xlane.xlu0 %1137
        %v1139 = vadd.f32 %v1132, %v1133
        %1140 = vadd.xlane.f32.xlu0 %v1139
        %v1141 = vpop.xlane.xlu0 %1140
        %v1142 = vmul.f32 %v1138, 0.00390625
        %v1143 = vmul.f32 %v1141, 0.00390625
        %v1144 = vld [vmem:[%s5] sm:$0xf]
        %v1145 = vld [vmem:[#allocation5] sm:$0xf]
        %1147 = vrot.lane.b32.xlu0 %v1145, 117
        %v1148 = vpop.permute.xlu0 %1147
        %vm1150 = vcmask 130048
        %v1152 = vsel %vm1150, %v1144, 0
        %1154 = vmatprep.subr.mxu0 0.0
        %1155 = vmatpush1.msra.mxu0 %v1142
        %1156 = vmatprep.subr.mxu0 0.0
        %1157 = vmatpush1.msra.mxu0 %v1143
        %1158 = vmatprep.subr.mxu0 0.0
        %1159 = vmatpush1.msra.mxu0 0.0
        %1160 = vmatprep.subr.mxu0 0.0
        %1161 = vmatpush1.msra.mxu0 0.0
        %1162 = vmatprep.subr.mxu0 0.0
        %1163 = vmatpush1.msra.mxu0 0.0
        %1164 = vmatprep.subr.mxu0 0.0
        %1165 = vmatpush1.msra.mxu0 0.0
        %1166 = vmatprep.subr.mxu0 0.0
        %1167 = vmatpush1.msra.mxu0 0.0
        %1168 = vmatprep.subr.mxu0 0.0
        %1169 = vmatpush1.msra.mxu0 0.0
        %1170 = vmatprep.subr.mxu0 0.0
        %1171 = vmatpush1.msra.mxu0 0.0
        %1172 = vmatprep.subr.mxu0 0.0
        %1173 = vmatpush1.msra.mxu0 0.0
        %1174 = vmatprep.subr.mxu0 0.0
        %1175 = vmatpush1.msra.mxu0 0.0
        %1176 = vmatprep.subr.mxu0 0.0
        %1177 = vmatpush1.msra.mxu0 0.0
        %1178 = vmatprep.subr.mxu0 0.0
        %1179 = vmatpush1.msra.mxu0 0.0
        %1180 = vmatprep.subr.mxu0 0.0
        %1181 = vmatpush1.msra.mxu0 0.0
        %1182 = vmatprep.subr.mxu0 0.0
        %1183 = vmatpush1.msra.mxu0 0.0
        %1184 = vmatprep.subr.mxu0 0.0
        %1185 = vmatpush1.msra.mxu0 0.0
        %1186 = vmatprep.subr.mxu0 0.0
        %1187 = vmatpush1.msra.mxu0 0.0
        %1188 = vmatprep.subr.mxu0 0.0
        %1189 = vmatpush1.msra.mxu0 0.0
        %1190 = vmatprep.subr.mxu0 0.0
        %1191 = vmatpush1.msra.mxu0 0.0
        %1192 = vmatprep.subr.mxu0 0.0
        %1193 = vmatpush1.msra.mxu0 0.0
        %1194 = vmatprep.subr.mxu0 0.0
        %1195 = vmatpush1.msra.mxu0 0.0
        %1196 = vmatprep.subr.mxu0 0.0
        %1197 = vmatpush1.msra.mxu0 0.0
        %1198 = vmatprep.subr.mxu0 0.0
        %1199 = vmatpush1.msra.mxu0 0.0
        %1200 = vmatprep.subr.mxu0 0.0
        %1201 = vmatpush1.msra.mxu0 0.0
        %1202 = vmatprep.subr.mxu0 0.0
        %1203 = vmatpush1.msra.mxu0 0.0
        %1204 = vmatprep.subr.mxu0 0.0
        %1205 = vmatpush1.msra.mxu0 0.0
        %1206 = vmatprep.subr.mxu0 0.0
        %1207 = vmatpush1.msra.mxu0 0.0
        %1208 = vmatprep.subr.mxu0 0.0
        %1209 = vmatpush1.msra.mxu0 0.0
        %1210 = vmatprep.subr.mxu0 0.0
        %1211 = vmatpush1.msra.mxu0 0.0
        %1212 = vmatprep.subr.mxu0 0.0
        %1213 = vmatpush1.msra.mxu0 0.0
        %1214 = vmatprep.subr.mxu0 0.0
        %1215 = vmatpush1.msra.mxu0 0.0
        %1216 = vmatprep.subr.mxu0 0.0
        %1217 = vmatpush1.msra.mxu0 0.0
        %1218 = vmatprep.mubr.f32.mxu0 0.0
        %1219 = vmatmul.mubr.f32.gmra.mrb[0].mxu0 %v1152
        %v1220 = vpop.f32.mrb[0].mxu0
        %v1221 = vadd.f32 %v1148, %v1220
        %v1222 = vpop.f32.mrb[0].mxu0
        %1223 = vdwg.mxu0
        %v1224 = vmax.f32 %v1221, 0.0
        %v1225 = vld [vmem:[%s6] sm:$0xff]
        %v1226 = vld [vmem:[%s6 + $0x8] sm:$0xff]
        %1227 = vrot.lane.b32.xlu0 %v327, 116
        %v1228 = vpop.permute.xlu0 %1227
        %1229 = vrot.lane.b32.xlu0 %v328, 116
        %v1230 = vpop.permute.xlu0 %1229
        %vm1233 = vcmask 31744
        %v1235 = vsel %vm1233, %v1225, 0
        %v1238 = vsel %vm1233, %v1226, 0
        %v1241 = vsel %vm348, %v1224, 0
        %1243 = vmatprep.subr.mxu0 0.0
        %1244 = vmatpush1.msra.mxu0 %v1241
        %1245 = vmatprep.subr.mxu0 0.0
        %1246 = vmatpush1.msra.mxu0 0.0
        %1247 = vmatprep.subr.mxu0 0.0
        %1248 = vmatpush1.msra.mxu0 0.0
        %1249 = vmatprep.subr.mxu0 0.0
        %1250 = vmatpush1.msra.mxu0 0.0
        %1251 = vmatprep.subr.mxu0 0.0
        %1252 = vmatpush1.msra.mxu0 0.0
        %1253 = vmatprep.subr.mxu0 0.0
        %1254 = vmatpush1.msra.mxu0 0.0
        %1255 = vmatprep.subr.mxu0 0.0
        %1256 = vmatpush1.msra.mxu0 0.0
        %1257 = vmatprep.subr.mxu0 0.0
        %1258 = vmatpush1.msra.mxu0 0.0
        %1259 = vmatprep.subr.mxu0 0.0
        %1260 = vmatpush1.msra.mxu0 0.0
        %1261 = vmatprep.subr.mxu0 0.0
        %1262 = vmatpush1.msra.mxu0 0.0
        %1263 = vmatprep.subr.mxu0 0.0
        %1264 = vmatpush1.msra.mxu0 0.0
        %1265 = vmatprep.subr.mxu0 0.0
        %1266 = vmatpush1.msra.mxu0 0.0
        %1267 = vmatprep.subr.mxu0 0.0
        %1268 = vmatpush1.msra.mxu0 0.0
        %1269 = vmatprep.subr.mxu0 0.0
        %1270 = vmatpush1.msra.mxu0 0.0
        %1271 = vmatprep.subr.mxu0 0.0
        %1272 = vmatpush1.msra.mxu0 0.0
        %1273 = vmatprep.subr.mxu0 0.0
        %1274 = vmatpush1.msra.mxu0 0.0
        %1275 = vmatprep.subr.mxu0 0.0
        %1276 = vmatpush1.msra.mxu0 0.0
        %1277 = vmatprep.subr.mxu0 0.0
        %1278 = vmatpush1.msra.mxu0 0.0
        %1279 = vmatprep.subr.mxu0 0.0
        %1280 = vmatpush1.msra.mxu0 0.0
        %1281 = vmatprep.subr.mxu0 0.0
        %1282 = vmatpush1.msra.mxu0 0.0
        %1283 = vmatprep.subr.mxu0 0.0
        %1284 = vmatpush1.msra.mxu0 0.0
        %1285 = vmatprep.subr.mxu0 0.0
        %1286 = vmatpush1.msra.mxu0 0.0
        %1287 = vmatprep.subr.mxu0 0.0
        %1288 = vmatpush1.msra.mxu0 0.0
        %1289 = vmatprep.subr.mxu0 0.0
        %1290 = vmatpush1.msra.mxu0 0.0
        %1291 = vmatprep.subr.mxu0 0.0
        %1292 = vmatpush1.msra.mxu0 0.0
        %1293 = vmatprep.subr.mxu0 0.0
        %1294 = vmatpush1.msra.mxu0 0.0
        %1295 = vmatprep.subr.mxu0 0.0
        %1296 = vmatpush1.msra.mxu0 0.0
        %1297 = vmatprep.subr.mxu0 0.0
        %1298 = vmatpush1.msra.mxu0 0.0
        %1299 = vmatprep.subr.mxu0 0.0
        %1300 = vmatpush1.msra.mxu0 0.0
        %1301 = vmatprep.subr.mxu0 0.0
        %1302 = vmatpush1.msra.mxu0 0.0
        %1303 = vmatprep.subr.mxu0 0.0
        %1304 = vmatpush1.msra.mxu0 0.0
        %1305 = vmatprep.subr.mxu0 0.0
        %1306 = vmatpush1.msra.mxu0 0.0
        %1307 = vmatprep.mubr.f32.mxu0 0.0
        %1308 = vmatmul.mubr.f32.gmra.mrb[0].mxu0 %v1235
        %v1309 = vpop.f32.mrb[0].mxu0
        %v1310 = vadd.f32 %v1228, %v1309
        %v1311 = vpop.f32.mrb[0].mxu0
        %1312 = vmatprep.mubr.f32.mxu0 0.0
        %1313 = vmatmul.mubr.f32.gmra.mrb[0].mxu0 %v1238
        %v1314 = vpop.f32.mrb[0].mxu0
        %v1315 = vadd.f32 %v1230, %v1314
        %v1316 = vpop.f32.mrb[0].mxu0
        %1317 = vdwg.mxu0
        %v1318 = vmul.f32 %v1310, 1.2
        %v1319 = vmul.f32 %v1315, 1.2
        %v1320 = vadd.f32 %v1318, 3.0
        %v1321 = vadd.f32 %v1319, 3.0
        %v1322 = vmax.f32 %v1320, 0.0
        %v1323 = vmax.f32 %v1321, 0.0
        %v1324 = vmin.f32 %v1322, 6.0
        %v1325 = vmin.f32 %v1323, 6.0
        %v1326 = vmul.f32 %v1324, 0.16666667
        %v1327 = vmul.f32 %v1325, 0.16666667
        %1329 = vset.pattern.permute.xlu0 0
        %1330 = vperm.xlu0 %1329, %v1326
        %v1331 = vpop.permute.xlu0 %1330
        %1334 = vset.pattern.permute.xlu0 0
        %1335 = vperm.xlu0 %1334, %v1327
        %v1336 = vpop.permute.xlu0 %1335
        %v1338 = vmul.f32 %v1128, %v1331
        %v1339 = vmul.f32 %v1129, %v1331
        %v1340 = vmul.f32 %v1132, %v1336
        %v1341 = vmul.f32 %v1133, %v1336
        %v1342 = vadd.f32 %v1130, %v1131
        %1343 = vadd.xlane.f32.xlu0 %v1342
        %v1344 = vpop.xlane.xlu0 %1343
        %v1345 = vadd.f32 %v1134, %v1135
        %1346 = vadd.xlane.f32.xlu0 %v1345
        %v1347 = vpop.xlane.xlu0 %1346
        %v1348 = vmul.f32 %v1344, 0.00390625
        %v1349 = vmul.f32 %v1347, 0.00390625
        %1350 = vmatprep.subr.mxu0 0.0
        %1351 = vmatpush1.msra.mxu0 %v1348
        %1352 = vmatprep.subr.mxu0 0.0
        %1353 = vmatpush1.msra.mxu0 %v1349
        %1354 = vmatprep.subr.mxu0 0.0
        %1355 = vmatpush1.msra.mxu0 0.0
        %1356 = vmatprep.subr.mxu0 0.0
        %1357 = vmatpush1.msra.mxu0 0.0
        %1358 = vmatprep.subr.mxu0 0.0
        %1359 = vmatpush1.msra.mxu0 0.0
        %1360 = vmatprep.subr.mxu0 0.0
        %1361 = vmatpush1.msra.mxu0 0.0
        %1362 = vmatprep.subr.mxu0 0.0
        %1363 = vmatpush1.msra.mxu0 0.0
        %1364 = vmatprep.subr.mxu0 0.0
        %1365 = vmatpush1.msra.mxu0 0.0
        %1366 = vmatprep.subr.mxu0 0.0
        %1367 = vmatpush1.msra.mxu0 0.0
        %1368 = vmatprep.subr.mxu0 0.0
        %1369 = vmatpush1.msra.mxu0 0.0
        %1370 = vmatprep.subr.mxu0 0.0
        %1371 = vmatpush1.msra.mxu0 0.0
        %1372 = vmatprep.subr.mxu0 0.0
        %1373 = vmatpush1.msra.mxu0 0.0
        %1374 = vmatprep.subr.mxu0 0.0
        %1375 = vmatpush1.msra.mxu0 0.0
        %1376 = vmatprep.subr.mxu0 0.0
        %1377 = vmatpush1.msra.mxu0 0.0
        %1378 = vmatprep.subr.mxu0 0.0
        %1379 = vmatpush1.msra.mxu0 0.0
        %1380 = vmatprep.subr.mxu0 0.0
        %1381 = vmatpush1.msra.mxu0 0.0
        %1382 = vmatprep.subr.mxu0 0.0
        %1383 = vmatpush1.msra.mxu0 0.0
        %1384 = vmatprep.subr.mxu0 0.0
        %1385 = vmatpush1.msra.mxu0 0.0
        %1386 = vmatprep.subr.mxu0 0.0
        %1387 = vmatpush1.msra.mxu0 0.0
        %1388 = vmatprep.subr.mxu0 0.0
        %1389 = vmatpush1.msra.mxu0 0.0
        %1390 = vmatprep.subr.mxu0 0.0
        %1391 = vmatpush1.msra.mxu0 0.0
        %1392 = vmatprep.subr.mxu0 0.0
        %1393 = vmatpush1.msra.mxu0 0.0
        %1394 = vmatprep.subr.mxu0 0.0
        %1395 = vmatpush1.msra.mxu0 0.0
        %1396 = vmatprep.subr.mxu0 0.0
        %1397 = vmatpush1.msra.mxu0 0.0
        %1398 = vmatprep.subr.mxu0 0.0
        %1399 = vmatpush1.msra.mxu0 0.0
        %1400 = vmatprep.subr.mxu0 0.0
        %1401 = vmatpush1.msra.mxu0 0.0
        %1402 = vmatprep.subr.mxu0 0.0
        %1403 = vmatpush1.msra.mxu0 0.0
        %1404 = vmatprep.subr.mxu0 0.0
        %1405 = vmatpush1.msra.mxu0 0.0
        %1406 = vmatprep.subr.mxu0 0.0
        %1407 = vmatpush1.msra.mxu0 0.0
        %1408 = vmatprep.subr.mxu0 0.0
        %1409 = vmatpush1.msra.mxu0 0.0
        %1410 = vmatprep.subr.mxu0 0.0
        %1411 = vmatpush1.msra.mxu0 0.0
        %1412 = vmatprep.subr.mxu0 0.0
        %1413 = vmatpush1.msra.mxu0 0.0
        %1414 = vmatprep.mubr.f32.mxu0 0.0
        %1415 = vmatmul.mubr.f32.gmra.mrb[0].mxu0 %v1152
        %v1416 = vpop.f32.mrb[0].mxu0
        %v1417 = vadd.f32 %v1148, %v1416
        %v1418 = vpop.f32.mrb[0].mxu0
        %1419 = vdwg.mxu0
        %v1420 = vmax.f32 %v1417, 0.0
        %v1422 = vsel %vm348, %v1420, 0
        %1424 = vmatprep.subr.mxu0 0.0
        %1425 = vmatpush1.msra.mxu0 %v1422
        %1426 = vmatprep.subr.mxu0 0.0
        %1427 = vmatpush1.msra.mxu0 0.0
        %1428 = vmatprep.subr.mxu0 0.0
        %1429 = vmatpush1.msra.mxu0 0.0
        %1430 = vmatprep.subr.mxu0 0.0
        %1431 = vmatpush1.msra.mxu0 0.0
        %1432 = vmatprep.subr.mxu0 0.0
        %1433 = vmatpush1.msra.mxu0 0.0
        %1434 = vmatprep.subr.mxu0 0.0
        %1435 = vmatpush1.msra.mxu0 0.0
        %1436 = vmatprep.subr.mxu0 0.0
        %1437 = vmatpush1.msra.mxu0 0.0
        %1438 = vmatprep.subr.mxu0 0.0
        %1439 = vmatpush1.msra.mxu0 0.0
        %1440 = vmatprep.subr.mxu0 0.0
        %1441 = vmatpush1.msra.mxu0 0.0
        %1442 = vmatprep.subr.mxu0 0.0
        %1443 = vmatpush1.msra.mxu0 0.0
        %1444 = vmatprep.subr.mxu0 0.0
        %1445 = vmatpush1.msra.mxu0 0.0
        %1446 = vmatprep.subr.mxu0 0.0
        %1447 = vmatpush1.msra.mxu0 0.0
        %1448 = vmatprep.subr.mxu0 0.0
        %1449 = vmatpush1.msra.mxu0 0.0
        %1450 = vmatprep.subr.mxu0 0.0
        %1451 = vmatpush1.msra.mxu0 0.0
        %1452 = vmatprep.subr.mxu0 0.0
        %1453 = vmatpush1.msra.mxu0 0.0
        %1454 = vmatprep.subr.mxu0 0.0
        %1455 = vmatpush1.msra.mxu0 0.0
        %1456 = vmatprep.subr.mxu0 0.0
        %1457 = vmatpush1.msra.mxu0 0.0
        %1458 = vmatprep.subr.mxu0 0.0
        %1459 = vmatpush1.msra.mxu0 0.0
        %1460 = vmatprep.subr.mxu0 0.0
        %1461 = vmatpush1.msra.mxu0 0.0
        %1462 = vmatprep.subr.mxu0 0.0
        %1463 = vmatpush1.msra.mxu0 0.0
        %1464 = vmatprep.subr.mxu0 0.0
        %1465 = vmatpush1.msra.mxu0 0.0
        %1466 = vmatprep.subr.mxu0 0.0
        %1467 = vmatpush1.msra.mxu0 0.0
        %1468 = vmatprep.subr.mxu0 0.0
        %1469 = vmatpush1.msra.mxu0 0.0
        %1470 = vmatprep.subr.mxu0 0.0
        %1471 = vmatpush1.msra.mxu0 0.0
        %1472 = vmatprep.subr.mxu0 0.0
        %1473 = vmatpush1.msra.mxu0 0.0
        %1474 = vmatprep.subr.mxu0 0.0
        %1475 = vmatpush1.msra.mxu0 0.0
        %1476 = vmatprep.subr.mxu0 0.0
        %1477 = vmatpush1.msra.mxu0 0.0
        %1478 = vmatprep.subr.mxu0 0.0
        %1479 = vmatpush1.msra.mxu0 0.0
        %1480 = vmatprep.subr.mxu0 0.0
        %1481 = vmatpush1.msra.mxu0 0.0
        %1482 = vmatprep.subr.mxu0 0.0
        %1483 = vmatpush1.msra.mxu0 0.0
        %1484 = vmatprep.subr.mxu0 0.0
        %1485 = vmatpush1.msra.mxu0 0.0
        %1486 = vmatprep.subr.mxu0 0.0
        %1487 = vmatpush1.msra.mxu0 0.0
        %1488 = vmatprep.mubr.f32.mxu0 0.0
        %1489 = vmatmul.mubr.f32.gmra.mrb[0].mxu0 %v1235
        %v1490 = vpop.f32.mrb[0].mxu0
        %v1491 = vadd.f32 %v1228, %v1490
        %v1492 = vpop.f32.mrb[0].mxu0
        %1493 = vmatprep.mubr.f32.mxu0 0.0
        %1494 = vmatmul.mubr.f32.gmra.mrb[0].mxu0 %v1238
        %v1495 = vpop.f32.mrb[0].mxu0
        %v1496 = vadd.f32 %v1230, %v1495
        %v1497 = vpop.f32.mrb[0].mxu0
        %1498 = vdwg.mxu0
        %v1499 = vmul.f32 %v1491, 1.2
        %v1500 = vmul.f32 %v1496, 1.2
        %v1501 = vadd.f32 %v1499, 3.0
        %v1502 = vadd.f32 %v1500, 3.0
        %v1503 = vmax.f32 %v1501, 0.0
        %v1504 = vmax.f32 %v1502, 0.0
        %v1505 = vmin.f32 %v1503, 6.0
        %v1506 = vmin.f32 %v1504, 6.0
        %v1507 = vmul.f32 %v1505, 0.16666667
        %v1508 = vmul.f32 %v1506, 0.16666667
        %1510 = vset.pattern.permute.xlu0 0
        %1511 = vperm.xlu0 %1510, %v1507
        %v1512 = vpop.permute.xlu0 %1511
        %1515 = vset.pattern.permute.xlu0 0
        %1516 = vperm.xlu0 %1515, %v1508
        %v1517 = vpop.permute.xlu0 %1516
        %v1519 = vmul.f32 %v1130, %v1512
        %v1520 = vmul.f32 %v1131, %v1512
        %v1521 = vmul.f32 %v1134, %v1517
        %v1522 = vmul.f32 %v1135, %v1517
        %v1523 = vld [vmem:[%s4] sm:$0xf]
        %v1524 = vpack.c.bf16 %v1340, %v1338
        %v1525 = vpack.c.bf16 %v1341, %v1339
        %v1526 = vpack.c.bf16 %v1521, %v1519
        %v1527 = vpack.c.bf16 %v1522, %v1520
        %v1528 = vld [vmem:[#allocation5] sm:$0xff]
        %1530 = vset.pattern.permute.xlu0 13
        %1531 = vperm.xlu0 %1530, %v1528
        %v1532 = vpop.permute.xlu0 %1531
        %v1535 = vsel %vm1150, %v1523, 0
        %1537 = vmatprep.subr.bf16.mxu0 %v1525
        %1538 = vmatpush1.bf16.msra.mxu0 %v1524
        %1539 = vmatprep.subr.bf16.mxu0 0
        %1540 = vmatpush1.bf16.msra.mxu0 0
        %1541 = vmatprep.subr.bf16.mxu0 0
        %1542 = vmatpush1.bf16.msra.mxu0 0
        %1543 = vmatprep.subr.bf16.mxu0 0
        %1544 = vmatpush1.bf16.msra.mxu0 0
        %1545 = vmatprep.subr.bf16.mxu0 0
        %1546 = vmatpush1.bf16.msra.mxu0 0
        %1547 = vmatprep.subr.bf16.mxu0 0
        %1548 = vmatpush1.bf16.msra.mxu0 0
        %1549 = vmatprep.subr.bf16.mxu0 0
        %1550 = vmatpush1.bf16.msra.mxu0 0
        %1551 = vmatprep.subr.bf16.mxu0 0
        %1552 = vmatpush1.bf16.msra.mxu0 0
        %1553 = vmatprep.subr.bf16.mxu0 0
        %1554 = vmatpush1.bf16.msra.mxu0 0
        %1555 = vmatprep.subr.bf16.mxu0 0
        %1556 = vmatpush1.bf16.msra.mxu0 0
        %1557 = vmatprep.subr.bf16.mxu0 0
        %1558 = vmatpush1.bf16.msra.mxu0 0
        %1559 = vmatprep.subr.bf16.mxu0 0
        %1560 = vmatpush1.bf16.msra.mxu0 0
        %1561 = vmatprep.subr.bf16.mxu0 0
        %1562 = vmatpush1.bf16.msra.mxu0 0
        %1563 = vmatprep.subr.bf16.mxu0 0
        %1564 = vmatpush1.bf16.msra.mxu0 0
        %1565 = vmatprep.subr.bf16.mxu0 0
        %1566 = vmatpush1.bf16.msra.mxu0 0
        %1567 = vmatprep.subr.bf16.mxu0 0
        %1568 = vmatpush1.bf16.msra.mxu0 0
        %1569 = vmatprep.mubr.bf16.mxu0 0
        %1570 = vmatmul.mubr.bf16.gmra.mrb[0].mxu0 %v1535
        %v1571 = vpop.f32.mrb[0].mxu0
        %v1572 = vadd.f32 %v1532, %v1571
        %v1573 = vpop.f32.mrb[0].mxu0
        %v1574 = vadd.f32 %v1532, %v1573
        %v1575 = vpop.f32.mrb[0].mxu0
        %v1576 = vpop.f32.mrb[0].mxu0
        %1577 = vdwg.mxu0
        %1578 = vmatprep.subr.bf16.mxu0 %v1527
        %1579 = vmatpush1.bf16.msra.mxu0 %v1526
        %1580 = vmatprep.subr.bf16.mxu0 0
        %1581 = vmatpush1.bf16.msra.mxu0 0
        %1582 = vmatprep.subr.bf16.mxu0 0
        %1583 = vmatpush1.bf16.msra.mxu0 0
        %1584 = vmatprep.subr.bf16.mxu0 0
        %1585 = vmatpush1.bf16.msra.mxu0 0
        %1586 = vmatprep.subr.bf16.mxu0 0
        %1587 = vmatpush1.bf16.msra.mxu0 0
        %1588 = vmatprep.subr.bf16.mxu0 0
        %1589 = vmatpush1.bf16.msra.mxu0 0
        %1590 = vmatprep.subr.bf16.mxu0 0
        %1591 = vmatpush1.bf16.msra.mxu0 0
        %1592 = vmatprep.subr.bf16.mxu0 0
        %1593 = vmatpush1.bf16.msra.mxu0 0
        %1594 = vmatprep.subr.bf16.mxu0 0
        %1595 = vmatpush1.bf16.msra.mxu0 0
        %1596 = vmatprep.subr.bf16.mxu0 0
        %1597 = vmatpush1.bf16.msra.mxu0 0
        %1598 = vmatprep.subr.bf16.mxu0 0
        %1599 = vmatpush1.bf16.msra.mxu0 0
        %1600 = vmatprep.subr.bf16.mxu0 0
        %1601 = vmatpush1.bf16.msra.mxu0 0
        %1602 = vmatprep.subr.bf16.mxu0 0
        %1603 = vmatpush1.bf16.msra.mxu0 0
        %1604 = vmatprep.subr.bf16.mxu0 0
        %1605 = vmatpush1.bf16.msra.mxu0 0
        %1606 = vmatprep.subr.bf16.mxu0 0
        %1607 = vmatpush1.bf16.msra.mxu0 0
        %1608 = vmatprep.subr.bf16.mxu0 0
        %1609 = vmatpush1.bf16.msra.mxu0 0
        %1610 = vmatprep.mubr.bf16.mxu0 0
        %1611 = vmatmul.mubr.bf16.gmra.mrb[0].mxu0 %v1535
        %v1612 = vpop.f32.mrb[0].mxu0
        %v1613 = vadd.f32 %v1532, %v1612
        %v1614 = vpop.f32.mrb[0].mxu0
        %v1615 = vadd.f32 %v1532, %v1614
        %v1616 = vpop.f32.mrb[0].mxu0
        %v1617 = vpop.f32.mrb[0].mxu0
        %1618 = vdwg.mxu0
        %v1619 = vadd.f32 %v1572, %v316
        %v1620 = vadd.f32 %v1574, %v317
        %v1621 = vadd.f32 %v1613, %v319
        %v1622 = vadd.f32 %v1615, %v320
        %1623 = vst [vmem:[%s312] sm:$0xff] %v1619
        %1624 = vst [vmem:[%s312 + $0x8] sm:$0xff] %v1620
        %s1625 = scalar_lea.vmem %s312, 16 [#allocation7]
        %1626 = vst [vmem:[%s1625] sm:$0xff] %v1621
        %1627 = vst [vmem:[%s1625 + $0x8] sm:$0xff] %v1622
        %s1628 = sand.u32 %s185, 1
        %s1629 = scalar_lea.sflag [#allocation4], %s1628
        %s1630 = sand.u32 %s185, 1
        %s1631 = smul.addr %s1630, 32
        %s1632 = scalar_lea.vmem [#allocation7], %s1631
        // Predicated region
        $region57: #{tpu_custom_call.1} parent=47 // pred_check
          %p1633 = pneg %p195
        $region58: #{tpu_custom_call.1} parent=47 // pred_check_branch
          %1635 = sbr.rel (%p1633) target = $region60
        $region59: #{tpu_custom_call.1} parent=47 // pred_region
          %s1636 = smul.u32 2, %s25
          %s1638 = ssub.s32 512, 512
          %1639 = vsyncadd %s1629, %s1638
          %s1640 = smul.addr %s1636, 2
          %s1641 = smul.addr %s1640, 128
          %s1642 = scalar_lea.hbm %s7, %s1641
          %s1643 = sshll.u32 %s1632, 4
          %s1644 = int_to_ptr.vmem [resolvable:$true] %s1643
          %1649 = dma.vmem_to_hbm [thread:$0]  %s1644, 512, %s1642, %s1629, 256, 256, 16
        $region60: #{tpu_custom_call.1} parent=47 // pred_fallthru
          _
      $region48: #{tpu_custom_call.1} parent=5 // pred_fallthru
        _
      %p1650 = scmp.le.s32.totalorder 2, %s20
      // Predicated region
      $region61: #{tpu_custom_call.1} parent=5 // pred_check
        %p1651 = pneg %p1650
      $region62: #{tpu_custom_call.1} parent=5 // pred_check_branch
        %1653 = sbr.rel (%p1651) target = $region64
      $region63: #{tpu_custom_call.1} parent=5 // pred_region
        %s1654 = ssub.s32 %s20, 2
        // Predicated region
        $region65: #{tpu_custom_call.1} parent=63 // pred_check
          %p1655 = pneg %p201
        $region66: #{tpu_custom_call.1} parent=63 // pred_check_branch
          %1657 = sbr.rel (%p1655) target = $region68
        $region67: #{tpu_custom_call.1} parent=63 // pred_region
          %s1658 = sand.u32 %s186, 1
          %s1659 = scalar_lea.sflag [#allocation4], %s1658
          %s1660 = sand.u32 %s186, 1
          %s1661 = smul.addr %s1660, 32
          %s1662 = scalar_lea.vmem [#allocation7], %s1661
          %1663 = dma.done %s1659, 512
        $region68: #{tpu_custom_call.1} parent=63 // pred_fallthru
          _
      $region64: #{tpu_custom_call.1} parent=5 // pred_fallthru
        _
    $region6: #{tpu_custom_call.1} parent=1 // loop_footer
      %s24 = sadd.s32 1, %s20
    $region7: #{tpu_custom_call.1} parent=1 // loop_footer_branch
      %19 = sbr.rel target = $region3
    $region8: #{tpu_custom_call.1} parent=1 // loop_exit
      _
    %1664 = vsyncpa [#allocation3], 1
    %s1665 = scalar_lea.sflag [#allocation3], 1
    %1666 = vsyncpa %s1665, 1
    %1667 = vsyncpa [#allocation6], 1
    %1668 = vsyncpa [#allocation4], 1
    %s1669 = scalar_lea.sflag [#allocation4], 1
    %1670 = vsyncpa %s1669, 1

</llo_original>
